<compile_context>
chip_gen: v7x
topology: tpu7x:2x2x1
jax: 0.10.0
libtpu: 0.0.40
codegen_flags: <defaults>
</compile_context>

<pallas_src>
from functools import lru_cache, partial

import jax
import jax.numpy as jnp
from jax.experimental import pallas as pl
from jax.experimental.pallas import tpu as pltpu

WIDTH = 128
IN_DIM = 28 * 28          # 784
PAD_IN = 896              # 7 * 128, lane-aligned K for the first matmul
OUT_DIM = 10
PAD_OUT = 128             # classifier padded to a full lane width
N_LAYERS = 9              # 8 hidden linears + classifier
MAX_TB = 512              # batch-tile cap
MIN_GRID_STEPS = 4        # target >= 4 grid steps for large B


def _round_up(x, m):
    return ((x + m - 1) // m) * m


@lru_cache(maxsize=None)
def _bf16_silu_ok():
    """bf16 SiLU epilogue only where the VPU/EUP support bf16 (v6e/v7x)."""
    try:
        kind = jax.devices()[0].device_kind.lower()
    except Exception:
        return False
    return ("v6" in kind) or ("v7" in kind)


def mlp_kernel(x_ref, *refs, bf16_silu):
    """refs = (w1, b1, ..., w9, b9, out_ref).

    x_ref:   (TB, 896) bf16 activation tile (cols 784..895 are zero padding)
    w_l:     (in, out) bf16, VMEM-resident across the whole grid (constant index_map)
    b_l:     (1, out)  f32
    out_ref: (TB, 128) bf16 (lane-dense; cols 10..127 are padding)
    """
    out_ref = refs[-1]
    prm = refs[:-1]

    h = x_ref[...]  # bf16
    for layer in range(N_LAYERS):
        w = prm[2 * layer][...]        # bf16 (in, out)
        b = prm[2 * layer + 1][...]    # f32  (1, out)
        acc = jnp.dot(h, w, preferred_element_type=jnp.float32) + b  # f32 MXU accum
        if layer < N_LAYERS - 1:
            if bf16_silu:
                # v6e/v7x: bf16 EUP/VPU -> halve epilogue slot pressure.
                h16 = acc.astype(jnp.bfloat16)
                h = h16 * jax.nn.sigmoid(h16)
            else:
                # v5e and older: no bf16 VPU/EUP -> keep SiLU in f32.
                h = (acc * jax.nn.sigmoid(acc)).astype(jnp.bfloat16)
        else:
            h = acc.astype(jnp.bfloat16)
    out_ref[...] = h  # bf16 lane-dense store


def init_params(key):
    """PyTorch nn.Linear-style init: U(-k, k), k = 1/sqrt(fan_in).

    Weights stored as (in_features, out_features) so the kernel computes y = x @ W + b.
    """
    dims = [IN_DIM] + [WIDTH] * 8 + [OUT_DIM]
    params = []
    for i in range(N_LAYERS):
        fan_in, fan_out = dims[i], dims[i + 1]
        key, kw, kb = jax.random.split(key, 3)
        bound = 1.0 / (fan_in ** 0.5)
        w = jax.random.uniform(kw, (fan_in, fan_out), jnp.float32, -bound, bound)
        b = jax.random.uniform(kb, (1, fan_out), jnp.float32, -bound, bound)
        params.append((w, b))
    return params


@jax.jit
def simple_mlp_silu_forward(x, params):
    """x: (B, 1, 28, 28) or (B, 784) float32 -> logits (B, 10) float32."""
    if x.ndim > 2:
        x = x.reshape(x.shape[0], -1)  # nn.Flatten
    B = x.shape[0]

    # ---- batch tile: multiple of 16 (bf16 rows/vreg), >= MIN_GRID_STEPS steps, cap 512
    tb = max(16, min(MAX_TB, _round_up(pl.cdiv(B, MIN_GRID_STEPS), 16)))
    Bp = _round_up(B, tb)

    # Single fused cast+pad pass over the input (no zeros+scatter, no second HBM
    # pass); row padding is a width-0 no-op when B is already a multiple of tb.
    x_pad = jnp.pad(x.astype(jnp.bfloat16), ((0, Bp - B), (0, PAD_IN - IN_DIM)))

    # ---- parameters: bf16 weights, f32 biases; pad W1 rows 784->896 and classifier 10->128
    flat_params = []
    for layer, (w, b) in enumerate(params):
        if layer == 0:
            w = jnp.pad(w, ((0, PAD_IN - IN_DIM), (0, 0)))
        if layer == N_LAYERS - 1:
            w = jnp.pad(w, ((0, 0), (0, PAD_OUT - OUT_DIM)))
            b = jnp.pad(b, ((0, 0), (0, PAD_OUT - OUT_DIM)))
        flat_params.append(w.astype(jnp.bfloat16))
        flat_params.append(b.astype(jnp.float32))

    grid = (Bp // tb,)

    x_spec = pl.BlockSpec((tb, PAD_IN), lambda i: (i, 0))
    param_specs = [
        pl.BlockSpec(p.shape, lambda i: (0, 0))  # constant index_map -> VMEM-resident
        for p in flat_params
    ]
    out_spec = pl.BlockSpec((tb, PAD_OUT), lambda i: (i, 0))

    # Advisory cost estimate for XLA scheduling around the custom call.
    mm_flops = 2 * Bp * (PAD_IN * WIDTH + (N_LAYERS - 2) * WIDTH * WIDTH + WIDTH * PAD_OUT)
    w_bytes = 2 * (PAD_IN * WIDTH + (N_LAYERS - 2) * WIDTH * WIDTH + WIDTH * PAD_OUT)
    b_bytes = 4 * ((N_LAYERS - 1) * WIDTH + PAD_OUT)
    cost = pl.CostEstimate(
        flops=mm_flops,
        transcendentals=Bp * WIDTH * (N_LAYERS - 1),
        bytes_accessed=Bp * PAD_IN * 2 + w_bytes + b_bytes + Bp * PAD_OUT * 2,
    )

    out_pad = pl.pallas_call(
        partial(mlp_kernel, bf16_silu=_bf16_silu_ok()),
        out_shape=jax.ShapeDtypeStruct((Bp, PAD_OUT), jnp.bfloat16),
        grid=grid,
        in_specs=[x_spec] + param_specs,
        out_specs=out_spec,
        compiler_params=pltpu.CompilerParams(
            dimension_semantics=("parallel",),   # shards batch grid across v7x's 2 TCs
            vmem_limit_bytes=32 * 1024 * 1024,   # not binding (~3 MiB footprint at tb=512)
        ),
        cost_estimate=cost,
    )(x_pad, *flat_params)

    return out_pad[:B, :OUT_DIM].astype(jnp.float32)


if __name__ == "__main__":
    key = jax.random.PRNGKey(0)
    key, kx = jax.random.split(key)

    B = 8
    x = jax.random.normal(kx, (B, 1, 28, 28), jnp.float32)  # FMNIST-like NCHW
    params = init_params(key)

    out = jax.block_until_ready(simple_mlp_silu_forward(x, params))

    # Pure-JAX reference mimicking the kernel's numerics (bf16 matmuls, f32 accum,
    # SiLU in bf16 on v6e/v7x else f32, bf16 logits). Padding cancels exactly
    # (zero x columns x zero W1 rows), so the reference can use unpadded shapes.
    bf16_silu = _bf16_silu_ok()
    h = x.reshape(B, -1).astype(jnp.bfloat16)
    for i, (w, b) in enumerate(params):
        acc = jnp.dot(h, w.astype(jnp.bfloat16), preferred_element_type=jnp.float32) + b
        if i < N_LAYERS - 1:
            if bf16_silu:
                h16 = acc.astype(jnp.bfloat16)
                h = h16 * jax.nn.sigmoid(h16)
            else:
                h = (acc * jax.nn.sigmoid(acc)).astype(jnp.bfloat16)
        else:
            h = acc.astype(jnp.bfloat16)
    ref = h.astype(jnp.float32)

    assert out.shape == (B, OUT_DIM)
    # Tolerance accounts for bf16 rounding and EUP-vs-XLA sigmoid ulp differences.
    assert jnp.allclose(out, ref, atol=2e-2, rtol=2e-2), "mismatch vs reference"

    print("KERNEL_OK")
</pallas_src>

<mosaic_0001>
module attributes {stable_mosaic.version = 11 : i64} {
  func.func @mlp_kernel(%arg0: i32, %arg1: memref<16x896xbf16, #tpu.memory_space<vmem>>, %arg2: memref<896x128xbf16, #tpu.memory_space<vmem>>, %arg3: memref<1x128xf32, #tpu.memory_space<vmem>>, %arg4: memref<128x128xbf16, #tpu.memory_space<vmem>>, %arg5: memref<1x128xf32, #tpu.memory_space<vmem>>, %arg6: memref<128x128xbf16, #tpu.memory_space<vmem>>, %arg7: memref<1x128xf32, #tpu.memory_space<vmem>>, %arg8: memref<128x128xbf16, #tpu.memory_space<vmem>>, %arg9: memref<1x128xf32, #tpu.memory_space<vmem>>, %arg10: memref<128x128xbf16, #tpu.memory_space<vmem>>, %arg11: memref<1x128xf32, #tpu.memory_space<vmem>>, %arg12: memref<128x128xbf16, #tpu.memory_space<vmem>>, %arg13: memref<1x128xf32, #tpu.memory_space<vmem>>, %arg14: memref<128x128xbf16, #tpu.memory_space<vmem>>, %arg15: memref<1x128xf32, #tpu.memory_space<vmem>>, %arg16: memref<128x128xbf16, #tpu.memory_space<vmem>>, %arg17: memref<1x128xf32, #tpu.memory_space<vmem>>, %arg18: memref<128x128xbf16, #tpu.memory_space<vmem>>, %arg19: memref<1x128xf32, #tpu.memory_space<vmem>>, %arg20: memref<16x128xbf16, #tpu.memory_space<vmem>>) attributes {dimension_semantics = [#tpu.dimension_semantics<parallel>], iteration_bounds = array<i64: 1>, scalar_prefetch = 0 : i64, scratch_operands = 0 : i64, tpu.core_type = #tpu.core_type<tc>, window_params = [{transform_indices = @transform_0, window_bounds = array<i64: 16, 896>}, {pipeline_mode = #tpu.pipeline_mode<synchronous>, transform_indices = @transform_1, window_bounds = array<i64: 896, 128>}, {pipeline_mode = #tpu.pipeline_mode<synchronous>, transform_indices = @transform_2, window_bounds = array<i64: 1, 128>}, {pipeline_mode = #tpu.pipeline_mode<synchronous>, transform_indices = @transform_3, window_bounds = array<i64: 128, 128>}, {pipeline_mode = #tpu.pipeline_mode<synchronous>, transform_indices = @transform_4, window_bounds = array<i64: 1, 128>}, {pipeline_mode = #tpu.pipeline_mode<synchronous>, transform_indices = @transform_5, window_bounds = array<i64: 128, 128>}, {pipeline_mode = #tpu.pipeline_mode<synchronous>, transform_indices = @transform_6, window_bounds = array<i64: 1, 128>}, {pipeline_mode = #tpu.pipeline_mode<synchronous>, transform_indices = @transform_7, window_bounds = array<i64: 128, 128>}, {pipeline_mode = #tpu.pipeline_mode<synchronous>, transform_indices = @transform_8, window_bounds = array<i64: 1, 128>}, {pipeline_mode = #tpu.pipeline_mode<synchronous>, transform_indices = @transform_9, window_bounds = array<i64: 128, 128>}, {pipeline_mode = #tpu.pipeline_mode<synchronous>, transform_indices = @transform_10, window_bounds = array<i64: 1, 128>}, {pipeline_mode = #tpu.pipeline_mode<synchronous>, transform_indices = @transform_11, window_bounds = array<i64: 128, 128>}, {pipeline_mode = #tpu.pipeline_mode<synchronous>, transform_indices = @transform_12, window_bounds = array<i64: 1, 128>}, {pipeline_mode = #tpu.pipeline_mode<synchronous>, transform_indices = @transform_13, window_bounds = array<i64: 128, 128>}, {pipeline_mode = #tpu.pipeline_mode<synchronous>, transform_indices = @transform_14, window_bounds = array<i64: 1, 128>}, {pipeline_mode = #tpu.pipeline_mode<synchronous>, transform_indices = @transform_15, window_bounds = array<i64: 128, 128>}, {pipeline_mode = #tpu.pipeline_mode<synchronous>, transform_indices = @transform_16, window_bounds = array<i64: 1, 128>}, {pipeline_mode = #tpu.pipeline_mode<synchronous>, transform_indices = @transform_17, window_bounds = array<i64: 128, 128>}, {pipeline_mode = #tpu.pipeline_mode<synchronous>, transform_indices = @transform_18, window_bounds = array<i64: 1, 128>}, {transform_indices = @transform_19, window_bounds = array<i64: 16, 128>}]} {
    %c0 = arith.constant 0 : index
    %c0_0 = arith.constant 0 : index
    %0 = vector.load %arg1[%c0, %c0_0] : memref<16x896xbf16, #tpu.memory_space<vmem>>, vector<16x896xbf16>
    %c0_1 = arith.constant 0 : index
    %c0_2 = arith.constant 0 : index
    %1 = vector.load %arg2[%c0_1, %c0_2] : memref<896x128xbf16, #tpu.memory_space<vmem>>, vector<896x128xbf16>
    %c0_3 = arith.constant 0 : index
    %c0_4 = arith.constant 0 : index
    %2 = vector.load %arg3[%c0_3, %c0_4] : memref<1x128xf32, #tpu.memory_space<vmem>>, vector<1x128xf32>
    %cst = arith.constant dense<0.000000e+00> : vector<16x128xf32>
    %3 = tpu.matmul %0, %1, %cst {dimension_numbers = #tpu.dot_dimension_numbers<[1], [0], [0], [1], [0, 0, 1, 1], [], []>} : vector<16x896xbf16>, vector<896x128xbf16>, vector<16x128xf32> -> vector<16x128xf32>
    %4 = vector.broadcast %2 : vector<1x128xf32> to vector<16x128xf32>
    %5 = arith.addf %3, %4 : vector<16x128xf32>
    %6 = arith.negf %5 : vector<16x128xf32>
    %7 = math.exp %6 : vector<16x128xf32>
    %cst_5 = arith.constant 1.000000e+00 : f32
    %8 = vector.broadcast %cst_5 : f32 to vector<16x128xf32>
    %9 = arith.addf %8, %7 : vector<16x128xf32>
    %10 = arith.divf %8, %9 : vector<16x128xf32>
    %11 = arith.mulf %5, %10 : vector<16x128xf32>
    %12 = arith.truncf %11 : vector<16x128xf32> to vector<16x128xbf16>
    %c0_6 = arith.constant 0 : index
    %c0_7 = arith.constant 0 : index
    %13 = vector.load %arg4[%c0_6, %c0_7] : memref<128x128xbf16, #tpu.memory_space<vmem>>, vector<128x128xbf16>
    %c0_8 = arith.constant 0 : index
    %c0_9 = arith.constant 0 : index
    %14 = vector.load %arg5[%c0_8, %c0_9] : memref<1x128xf32, #tpu.memory_space<vmem>>, vector<1x128xf32>
    %cst_10 = arith.constant dense<0.000000e+00> : vector<16x128xf32>
    %15 = tpu.matmul %12, %13, %cst_10 {dimension_numbers = #tpu.dot_dimension_numbers<[1], [0], [0], [1], [0, 0, 1, 1], [], []>} : vector<16x128xbf16>, vector<128x128xbf16>, vector<16x128xf32> -> vector<16x128xf32>
    %16 = vector.broadcast %14 : vector<1x128xf32> to vector<16x128xf32>
    %17 = arith.addf %15, %16 : vector<16x128xf32>
    %18 = arith.negf %17 : vector<16x128xf32>
    %19 = math.exp %18 : vector<16x128xf32>
    %cst_11 = arith.constant 1.000000e+00 : f32
    %20 = vector.broadcast %cst_11 : f32 to vector<16x128xf32>
    %21 = arith.addf %20, %19 : vector<16x128xf32>
    %22 = arith.divf %20, %21 : vector<16x128xf32>
    %23 = arith.mulf %17, %22 : vector<16x128xf32>
    %24 = arith.truncf %23 : vector<16x128xf32> to vector<16x128xbf16>
    %c0_12 = arith.constant 0 : index
    %c0_13 = arith.constant 0 : index
    %25 = vector.load %arg6[%c0_12, %c0_13] : memref<128x128xbf16, #tpu.memory_space<vmem>>, vector<128x128xbf16>
    %c0_14 = arith.constant 0 : index
    %c0_15 = arith.constant 0 : index
    %26 = vector.load %arg7[%c0_14, %c0_15] : memref<1x128xf32, #tpu.memory_space<vmem>>, vector<1x128xf32>
    %cst_16 = arith.constant dense<0.000000e+00> : vector<16x128xf32>
    %27 = tpu.matmul %24, %25, %cst_16 {dimension_numbers = #tpu.dot_dimension_numbers<[1], [0], [0], [1], [0, 0, 1, 1], [], []>} : vector<16x128xbf16>, vector<128x128xbf16>, vector<16x128xf32> -> vector<16x128xf32>
    %28 = vector.broadcast %26 : vector<1x128xf32> to vector<16x128xf32>
    %29 = arith.addf %27, %28 : vector<16x128xf32>
    %30 = arith.negf %29 : vector<16x128xf32>
    %31 = math.exp %30 : vector<16x128xf32>
    %cst_17 = arith.constant 1.000000e+00 : f32
    %32 = vector.broadcast %cst_17 : f32 to vector<16x128xf32>
    %33 = arith.addf %32, %31 : vector<16x128xf32>
    %34 = arith.divf %32, %33 : vector<16x128xf32>
    %35 = arith.mulf %29, %34 : vector<16x128xf32>
    %36 = arith.truncf %35 : vector<16x128xf32> to vector<16x128xbf16>
    %c0_18 = arith.constant 0 : index
    %c0_19 = arith.constant 0 : index
    %37 = vector.load %arg8[%c0_18, %c0_19] : memref<128x128xbf16, #tpu.memory_space<vmem>>, vector<128x128xbf16>
    %c0_20 = arith.constant 0 : index
    %c0_21 = arith.constant 0 : index
    %38 = vector.load %arg9[%c0_20, %c0_21] : memref<1x128xf32, #tpu.memory_space<vmem>>, vector<1x128xf32>
    %cst_22 = arith.constant dense<0.000000e+00> : vector<16x128xf32>
    %39 = tpu.matmul %36, %37, %cst_22 {dimension_numbers = #tpu.dot_dimension_numbers<[1], [0], [0], [1], [0, 0, 1, 1], [], []>} : vector<16x128xbf16>, vector<128x128xbf16>, vector<16x128xf32> -> vector<16x128xf32>
    %40 = vector.broadcast %38 : vector<1x128xf32> to vector<16x128xf32>
    %41 = arith.addf %39, %40 : vector<16x128xf32>
    %42 = arith.negf %41 : vector<16x128xf32>
    %43 = math.exp %42 : vector<16x128xf32>
    %cst_23 = arith.constant 1.000000e+00 : f32
    %44 = vector.broadcast %cst_23 : f32 to vector<16x128xf32>
    %45 = arith.addf %44, %43 : vector<16x128xf32>
    %46 = arith.divf %44, %45 : vector<16x128xf32>
    %47 = arith.mulf %41, %46 : vector<16x128xf32>
    %48 = arith.truncf %47 : vector<16x128xf32> to vector<16x128xbf16>
    %c0_24 = arith.constant 0 : index
    %c0_25 = arith.constant 0 : index
    %49 = vector.load %arg10[%c0_24, %c0_25] : memref<128x128xbf16, #tpu.memory_space<vmem>>, vector<128x128xbf16>
    %c0_26 = arith.constant 0 : index
    %c0_27 = arith.constant 0 : index
    %50 = vector.load %arg11[%c0_26, %c0_27] : memref<1x128xf32, #tpu.memory_space<vmem>>, vector<1x128xf32>
    %cst_28 = arith.constant dense<0.000000e+00> : vector<16x128xf32>
    %51 = tpu.matmul %48, %49, %cst_28 {dimension_numbers = #tpu.dot_dimension_numbers<[1], [0], [0], [1], [0, 0, 1, 1], [], []>} : vector<16x128xbf16>, vector<128x128xbf16>, vector<16x128xf32> -> vector<16x128xf32>
    %52 = vector.broadcast %50 : vector<1x128xf32> to vector<16x128xf32>
    %53 = arith.addf %51, %52 : vector<16x128xf32>
    %54 = arith.negf %53 : vector<16x128xf32>
    %55 = math.exp %54 : vector<16x128xf32>
    %cst_29 = arith.constant 1.000000e+00 : f32
    %56 = vector.broadcast %cst_29 : f32 to vector<16x128xf32>
    %57 = arith.addf %56, %55 : vector<16x128xf32>
    %58 = arith.divf %56, %57 : vector<16x128xf32>
    %59 = arith.mulf %53, %58 : vector<16x128xf32>
    %60 = arith.truncf %59 : vector<16x128xf32> to vector<16x128xbf16>
    %c0_30 = arith.constant 0 : index
    %c0_31 = arith.constant 0 : index
    %61 = vector.load %arg12[%c0_30, %c0_31] : memref<128x128xbf16, #tpu.memory_space<vmem>>, vector<128x128xbf16>
    %c0_32 = arith.constant 0 : index
    %c0_33 = arith.constant 0 : index
    %62 = vector.load %arg13[%c0_32, %c0_33] : memref<1x128xf32, #tpu.memory_space<vmem>>, vector<1x128xf32>
    %cst_34 = arith.constant dense<0.000000e+00> : vector<16x128xf32>
    %63 = tpu.matmul %60, %61, %cst_34 {dimension_numbers = #tpu.dot_dimension_numbers<[1], [0], [0], [1], [0, 0, 1, 1], [], []>} : vector<16x128xbf16>, vector<128x128xbf16>, vector<16x128xf32> -> vector<16x128xf32>
    %64 = vector.broadcast %62 : vector<1x128xf32> to vector<16x128xf32>
    %65 = arith.addf %63, %64 : vector<16x128xf32>
    %66 = arith.negf %65 : vector<16x128xf32>
    %67 = math.exp %66 : vector<16x128xf32>
    %cst_35 = arith.constant 1.000000e+00 : f32
    %68 = vector.broadcast %cst_35 : f32 to vector<16x128xf32>
    %69 = arith.addf %68, %67 : vector<16x128xf32>
    %70 = arith.divf %68, %69 : vector<16x128xf32>
    %71 = arith.mulf %65, %70 : vector<16x128xf32>
    %72 = arith.truncf %71 : vector<16x128xf32> to vector<16x128xbf16>
    %c0_36 = arith.constant 0 : index
    %c0_37 = arith.constant 0 : index
    %73 = vector.load %arg14[%c0_36, %c0_37] : memref<128x128xbf16, #tpu.memory_space<vmem>>, vector<128x128xbf16>
    %c0_38 = arith.constant 0 : index
    %c0_39 = arith.constant 0 : index
    %74 = vector.load %arg15[%c0_38, %c0_39] : memref<1x128xf32, #tpu.memory_space<vmem>>, vector<1x128xf32>
    %cst_40 = arith.constant dense<0.000000e+00> : vector<16x128xf32>
    %75 = tpu.matmul %72, %73, %cst_40 {dimension_numbers = #tpu.dot_dimension_numbers<[1], [0], [0], [1], [0, 0, 1, 1], [], []>} : vector<16x128xbf16>, vector<128x128xbf16>, vector<16x128xf32> -> vector<16x128xf32>
    %76 = vector.broadcast %74 : vector<1x128xf32> to vector<16x128xf32>
    %77 = arith.addf %75, %76 : vector<16x128xf32>
    %78 = arith.negf %77 : vector<16x128xf32>
    %79 = math.exp %78 : vector<16x128xf32>
    %cst_41 = arith.constant 1.000000e+00 : f32
    %80 = vector.broadcast %cst_41 : f32 to vector<16x128xf32>
    %81 = arith.addf %80, %79 : vector<16x128xf32>
    %82 = arith.divf %80, %81 : vector<16x128xf32>
    %83 = arith.mulf %77, %82 : vector<16x128xf32>
    %84 = arith.truncf %83 : vector<16x128xf32> to vector<16x128xbf16>
    %c0_42 = arith.constant 0 : index
    %c0_43 = arith.constant 0 : index
    %85 = vector.load %arg16[%c0_42, %c0_43] : memref<128x128xbf16, #tpu.memory_space<vmem>>, vector<128x128xbf16>
    %c0_44 = arith.constant 0 : index
    %c0_45 = arith.constant 0 : index
    %86 = vector.load %arg17[%c0_44, %c0_45] : memref<1x128xf32, #tpu.memory_space<vmem>>, vector<1x128xf32>
    %cst_46 = arith.constant dense<0.000000e+00> : vector<16x128xf32>
    %87 = tpu.matmul %84, %85, %cst_46 {dimension_numbers = #tpu.dot_dimension_numbers<[1], [0], [0], [1], [0, 0, 1, 1], [], []>} : vector<16x128xbf16>, vector<128x128xbf16>, vector<16x128xf32> -> vector<16x128xf32>
    %88 = vector.broadcast %86 : vector<1x128xf32> to vector<16x128xf32>
    %89 = arith.addf %87, %88 : vector<16x128xf32>
    %90 = arith.negf %89 : vector<16x128xf32>
    %91 = math.exp %90 : vector<16x128xf32>
    %cst_47 = arith.constant 1.000000e+00 : f32
    %92 = vector.broadcast %cst_47 : f32 to vector<16x128xf32>
    %93 = arith.addf %92, %91 : vector<16x128xf32>
    %94 = arith.divf %92, %93 : vector<16x128xf32>
    %95 = arith.mulf %89, %94 : vector<16x128xf32>
    %96 = arith.truncf %95 : vector<16x128xf32> to vector<16x128xbf16>
    %c0_48 = arith.constant 0 : index
    %c0_49 = arith.constant 0 : index
    %97 = vector.load %arg18[%c0_48, %c0_49] : memref<128x128xbf16, #tpu.memory_space<vmem>>, vector<128x128xbf16>
    %c0_50 = arith.constant 0 : index
    %c0_51 = arith.constant 0 : index
    %98 = vector.load %arg19[%c0_50, %c0_51] : memref<1x128xf32, #tpu.memory_space<vmem>>, vector<1x128xf32>
    %cst_52 = arith.constant dense<0.000000e+00> : vector<16x128xf32>
    %99 = tpu.matmul %96, %97, %cst_52 {dimension_numbers = #tpu.dot_dimension_numbers<[1], [0], [0], [1], [0, 0, 1, 1], [], []>} : vector<16x128xbf16>, vector<128x128xbf16>, vector<16x128xf32> -> vector<16x128xf32>
    %100 = vector.broadcast %98 : vector<1x128xf32> to vector<16x128xf32>
    %101 = arith.addf %99, %100 : vector<16x128xf32>
    %102 = arith.truncf %101 : vector<16x128xf32> to vector<16x128xbf16>
    %c0_53 = arith.constant 0 : index
    %c0_54 = arith.constant 0 : index
    %103 = vector.load %arg20[%c0_53, %c0_54] : memref<16x128xbf16, #tpu.memory_space<vmem>>, vector<16x128xbf16>
    tpu.vector_store %arg20[%c0_53, %c0_54], %102 {strides = array<i32>} : memref<16x128xbf16, #tpu.memory_space<vmem>>, vector<16x128xbf16>,
    return
  }
  func.func @transform_0(%arg0: i32) -> (i32, i32) {
    %c0_i32 = arith.constant 0 : i32
    %c0_i32_0 = arith.constant 0 : i32
    return %arg0, %c0_i32 : i32, i32
  }
  func.func @transform_1(%arg0: i32) -> (i32, i32) {
    %c0_i32 = arith.constant 0 : i32
    %c0_i32_0 = arith.constant 0 : i32
    %c0_i32_1 = arith.constant 0 : i32
    return %c0_i32, %c0_i32_0 : i32, i32
  }
  func.func @transform_2(%arg0: i32) -> (i32, i32) {
    %c0_i32 = arith.constant 0 : i32
    %c0_i32_0 = arith.constant 0 : i32
    %c0_i32_1 = arith.constant 0 : i32
    return %c0_i32, %c0_i32_0 : i32, i32
  }
  func.func @transform_3(%arg0: i32) -> (i32, i32) {
    %c0_i32 = arith.constant 0 : i32
    %c0_i32_0 = arith.constant 0 : i32
    %c0_i32_1 = arith.constant 0 : i32
    return %c0_i32, %c0_i32_0 : i32, i32
  }
  func.func @transform_4(%arg0: i32) -> (i32, i32) {
    %c0_i32 = arith.constant 0 : i32
    %c0_i32_0 = arith.constant 0 : i32
    %c0_i32_1 = arith.constant 0 : i32
    return %c0_i32, %c0_i32_0 : i32, i32
  }
  func.func @transform_5(%arg0: i32) -> (i32, i32) {
    %c0_i32 = arith.constant 0 : i32
    %c0_i32_0 = arith.constant 0 : i32
    %c0_i32_1 = arith.constant 0 : i32
    return %c0_i32, %c0_i32_0 : i32, i32
  }
  func.func @transform_6(%arg0: i32) -> (i32, i32) {
    %c0_i32 = arith.constant 0 : i32
    %c0_i32_0 = arith.constant 0 : i32
    %c0_i32_1 = arith.constant 0 : i32
    return %c0_i32, %c0_i32_0 : i32, i32
  }
  func.func @transform_7(%arg0: i32) -> (i32, i32) {
    %c0_i32 = arith.constant 0 : i32
    %c0_i32_0 = arith.constant 0 : i32
    %c0_i32_1 = arith.constant 0 : i32
    return %c0_i32, %c0_i32_0 : i32, i32
  }
  func.func @transform_8(%arg0: i32) -> (i32, i32) {
    %c0_i32 = arith.constant 0 : i32
    %c0_i32_0 = arith.constant 0 : i32
    %c0_i32_1 = arith.constant 0 : i32
    return %c0_i32, %c0_i32_0 : i32, i32
  }
  func.func @transform_9(%arg0: i32) -> (i32, i32) {
    %c0_i32 = arith.constant 0 : i32
    %c0_i32_0 = arith.constant 0 : i32
    %c0_i32_1 = arith.constant 0 : i32
    return %c0_i32, %c0_i32_0 : i32, i32
  }
  func.func @transform_10(%arg0: i32) -> (i32, i32) {
    %c0_i32 = arith.constant 0 : i32
    %c0_i32_0 = arith.constant 0 : i32
    %c0_i32_1 = arith.constant 0 : i32
    return %c0_i32, %c0_i32_0 : i32, i32
  }
  func.func @transform_11(%arg0: i32) -> (i32, i32) {
    %c0_i32 = arith.constant 0 : i32
    %c0_i32_0 = arith.constant 0 : i32
    %c0_i32_1 = arith.constant 0 : i32
    return %c0_i32, %c0_i32_0 : i32, i32
  }
  func.func @transform_12(%arg0: i32) -> (i32, i32) {
    %c0_i32 = arith.constant 0 : i32
    %c0_i32_0 = arith.constant 0 : i32
    %c0_i32_1 = arith.constant 0 : i32
    return %c0_i32, %c0_i32_0 : i32, i32
  }
  func.func @transform_13(%arg0: i32) -> (i32, i32) {
    %c0_i32 = arith.constant 0 : i32
    %c0_i32_0 = arith.constant 0 : i32
    %c0_i32_1 = arith.constant 0 : i32
    return %c0_i32, %c0_i32_0 : i32, i32
  }
  func.func @transform_14(%arg0: i32) -> (i32, i32) {
    %c0_i32 = arith.constant 0 : i32
    %c0_i32_0 = arith.constant 0 : i32
    %c0_i32_1 = arith.constant 0 : i32
    return %c0_i32, %c0_i32_0 : i32, i32
  }
  func.func @transform_15(%arg0: i32) -> (i32, i32) {
    %c0_i32 = arith.constant 0 : i32
    %c0_i32_0 = arith.constant 0 : i32
    %c0_i32_1 = arith.constant 0 : i32
    return %c0_i32, %c0_i32_0 : i32, i32
  }
  func.func @transform_16(%arg0: i32) -> (i32, i32) {
    %c0_i32 = arith.constant 0 : i32
    %c0_i32_0 = arith.constant 0 : i32
    %c0_i32_1 = arith.constant 0 : i32
    return %c0_i32, %c0_i32_0 : i32, i32
  }
  func.func @transform_17(%arg0: i32) -> (i32, i32) {
    %c0_i32 = arith.constant 0 : i32
    %c0_i32_0 = arith.constant 0 : i32
    %c0_i32_1 = arith.constant 0 : i32
    return %c0_i32, %c0_i32_0 : i32, i32
  }
  func.func @transform_18(%arg0: i32) -> (i32, i32) {
    %c0_i32 = arith.constant 0 : i32
    %c0_i32_0 = arith.constant 0 : i32
    %c0_i32_1 = arith.constant 0 : i32
    return %c0_i32, %c0_i32_0 : i32, i32
  }
  func.func @transform_19(%arg0: i32) -> (i32, i32) {
    %c0_i32 = arith.constant 0 : i32
    %c0_i32_0 = arith.constant 0 : i32
    return %arg0, %c0_i32 : i32, i32
  }
}

</mosaic_0001>

<llo_original>
// kernel: simple_mlp_silu_forward.1
$region0: #{simple_mlp_silu_forward.1}
  #allocation0 [shape = 'u32[]', space=smem, size = 0x4, offset = 0x4, fixed_abs, tag = 'smem constant byte address 0x4 - core index']
  #allocation1 [shape = 'u32[144,128]{1,0:T(1,128)}', space=vmem, size = 0x12000, scoped, tag = 'internal scratch']
  %s0 = inlined_call_operand.vmem [shape: bf16[16,896], index: 0, kind: input, shape index: {}]
  %s1 = inlined_call_operand.vmem [shape: bf16[896,128], index: 1, kind: input, shape index: {}]
  %s2 = inlined_call_operand.vmem [shape: f32[1,128], index: 2, kind: input, shape index: {}]
  %s3 = inlined_call_operand.vmem [shape: bf16[128,128], index: 3, kind: input, shape index: {}]
  %s4 = inlined_call_operand.vmem [shape: f32[1,128], index: 4, kind: input, shape index: {}]
  %s5 = inlined_call_operand.vmem [shape: bf16[128,128], index: 5, kind: input, shape index: {}]
  %s6 = inlined_call_operand.vmem [shape: f32[1,128], index: 6, kind: input, shape index: {}]
  %s7 = inlined_call_operand.vmem [shape: bf16[128,128], index: 7, kind: input, shape index: {}]
  %s8 = inlined_call_operand.vmem [shape: f32[1,128], index: 8, kind: input, shape index: {}]
  %s9 = inlined_call_operand.vmem [shape: bf16[128,128], index: 9, kind: input, shape index: {}]
  %s10 = inlined_call_operand.vmem [shape: f32[1,128], index: 10, kind: input, shape index: {}]
  %s11 = inlined_call_operand.vmem [shape: bf16[128,128], index: 11, kind: input, shape index: {}]
  %s12 = inlined_call_operand.vmem [shape: f32[1,128], index: 12, kind: input, shape index: {}]
  %s13 = inlined_call_operand.vmem [shape: bf16[128,128], index: 13, kind: input, shape index: {}]
  %s14 = inlined_call_operand.vmem [shape: f32[1,128], index: 14, kind: input, shape index: {}]
  %s15 = inlined_call_operand.vmem [shape: bf16[128,128], index: 15, kind: input, shape index: {}]
  %s16 = inlined_call_operand.vmem [shape: f32[1,128], index: 16, kind: input, shape index: {}]
  %s17 = inlined_call_operand.vmem [shape: bf16[128,128], index: 17, kind: input, shape index: {}]
  %s18 = inlined_call_operand.vmem [shape: f32[1,128], index: 18, kind: input, shape index: {}]
  %s19 = inlined_call_operand.vmem [shape: bf16[16,128], index: 19, kind: output, shape index: {}]
  %s20 = sld [smem:[#allocation0]]
  $region86: #{simple_mlp_silu_forward.1} parent=0
    _
  %s22 = ssub.s32 1, %s20
  %s23 = scalar_select 0, %s22, %s20
  // Predicated region
  $region2: #{simple_mlp_silu_forward.1} parent=0 // pred_check
    _
  $region3: #{simple_mlp_silu_forward.1} parent=0 // pred_check_branch
    %25 = sbr.rel (0) target = $region5
  $region4: #{simple_mlp_silu_forward.1} parent=0 // pred_region
    _
  $region5: #{simple_mlp_silu_forward.1} parent=0 // pred_fallthru
    _
  // Predicated region
  $region6: #{simple_mlp_silu_forward.1} parent=0 // pred_check
    _
  $region7: #{simple_mlp_silu_forward.1} parent=0 // pred_check_branch
    %27 = sbr.rel (0) target = $region9
  $region8: #{simple_mlp_silu_forward.1} parent=0 // pred_region
    _
  $region9: #{simple_mlp_silu_forward.1} parent=0 // pred_fallthru
    _
  // Predicated region
  $region10: #{simple_mlp_silu_forward.1} parent=0 // pred_check
    _
  $region11: #{simple_mlp_silu_forward.1} parent=0 // pred_check_branch
    %29 = sbr.rel (0) target = $region13
  $region12: #{simple_mlp_silu_forward.1} parent=0 // pred_region
    _
  $region13: #{simple_mlp_silu_forward.1} parent=0 // pred_fallthru
    _
  // Predicated region
  $region14: #{simple_mlp_silu_forward.1} parent=0 // pred_check
    _
  $region15: #{simple_mlp_silu_forward.1} parent=0 // pred_check_branch
    %31 = sbr.rel (0) target = $region17
  $region16: #{simple_mlp_silu_forward.1} parent=0 // pred_region
    _
  $region17: #{simple_mlp_silu_forward.1} parent=0 // pred_fallthru
    _
  // Predicated region
  $region18: #{simple_mlp_silu_forward.1} parent=0 // pred_check
    _
  $region19: #{simple_mlp_silu_forward.1} parent=0 // pred_check_branch
    %33 = sbr.rel (0) target = $region21
  $region20: #{simple_mlp_silu_forward.1} parent=0 // pred_region
    _
  $region21: #{simple_mlp_silu_forward.1} parent=0 // pred_fallthru
    _
  // Predicated region
  $region22: #{simple_mlp_silu_forward.1} parent=0 // pred_check
    _
  $region23: #{simple_mlp_silu_forward.1} parent=0 // pred_check_branch
    %35 = sbr.rel (0) target = $region25
  $region24: #{simple_mlp_silu_forward.1} parent=0 // pred_region
    _
  $region25: #{simple_mlp_silu_forward.1} parent=0 // pred_fallthru
    _
  // Predicated region
  $region26: #{simple_mlp_silu_forward.1} parent=0 // pred_check
    _
  $region27: #{simple_mlp_silu_forward.1} parent=0 // pred_check_branch
    %37 = sbr.rel (0) target = $region29
  $region28: #{simple_mlp_silu_forward.1} parent=0 // pred_region
    _
  $region29: #{simple_mlp_silu_forward.1} parent=0 // pred_fallthru
    _
  // Predicated region
  $region30: #{simple_mlp_silu_forward.1} parent=0 // pred_check
    _
  $region31: #{simple_mlp_silu_forward.1} parent=0 // pred_check_branch
    %39 = sbr.rel (0) target = $region33
  $region32: #{simple_mlp_silu_forward.1} parent=0 // pred_region
    _
  $region33: #{simple_mlp_silu_forward.1} parent=0 // pred_fallthru
    _
  // Predicated region
  $region34: #{simple_mlp_silu_forward.1} parent=0 // pred_check
    _
  $region35: #{simple_mlp_silu_forward.1} parent=0 // pred_check_branch
    %41 = sbr.rel (0) target = $region37
  $region36: #{simple_mlp_silu_forward.1} parent=0 // pred_region
    _
  $region37: #{simple_mlp_silu_forward.1} parent=0 // pred_fallthru
    _
  // Predicated region
  $region38: #{simple_mlp_silu_forward.1} parent=0 // pred_check
    _
  $region39: #{simple_mlp_silu_forward.1} parent=0 // pred_check_branch
    %43 = sbr.rel (0) target = $region41
  $region40: #{simple_mlp_silu_forward.1} parent=0 // pred_region
    _
  $region41: #{simple_mlp_silu_forward.1} parent=0 // pred_fallthru
    _
  // Predicated region
  $region42: #{simple_mlp_silu_forward.1} parent=0 // pred_check
    _
  $region43: #{simple_mlp_silu_forward.1} parent=0 // pred_check_branch
    %45 = sbr.rel (0) target = $region45
  $region44: #{simple_mlp_silu_forward.1} parent=0 // pred_region
    _
  $region45: #{simple_mlp_silu_forward.1} parent=0 // pred_fallthru
    _
  // Predicated region
  $region46: #{simple_mlp_silu_forward.1} parent=0 // pred_check
    _
  $region47: #{simple_mlp_silu_forward.1} parent=0 // pred_check_branch
    %47 = sbr.rel (0) target = $region49
  $region48: #{simple_mlp_silu_forward.1} parent=0 // pred_region
    _
  $region49: #{simple_mlp_silu_forward.1} parent=0 // pred_fallthru
    _
  // Predicated region
  $region50: #{simple_mlp_silu_forward.1} parent=0 // pred_check
    _
  $region51: #{simple_mlp_silu_forward.1} parent=0 // pred_check_branch
    %49 = sbr.rel (0) target = $region53
  $region52: #{simple_mlp_silu_forward.1} parent=0 // pred_region
    _
  $region53: #{simple_mlp_silu_forward.1} parent=0 // pred_fallthru
    _
  // Predicated region
  $region54: #{simple_mlp_silu_forward.1} parent=0 // pred_check
    _
  $region55: #{simple_mlp_silu_forward.1} parent=0 // pred_check_branch
    %51 = sbr.rel (0) target = $region57
  $region56: #{simple_mlp_silu_forward.1} parent=0 // pred_region
    _
  $region57: #{simple_mlp_silu_forward.1} parent=0 // pred_fallthru
    _
  // Predicated region
  $region58: #{simple_mlp_silu_forward.1} parent=0 // pred_check
    _
  $region59: #{simple_mlp_silu_forward.1} parent=0 // pred_check_branch
    %53 = sbr.rel (0) target = $region61
  $region60: #{simple_mlp_silu_forward.1} parent=0 // pred_region
    _
  $region61: #{simple_mlp_silu_forward.1} parent=0 // pred_fallthru
    _
  // Predicated region
  $region62: #{simple_mlp_silu_forward.1} parent=0 // pred_check
    _
  $region63: #{simple_mlp_silu_forward.1} parent=0 // pred_check_branch
    %55 = sbr.rel (0) target = $region65
  $region64: #{simple_mlp_silu_forward.1} parent=0 // pred_region
    _
  $region65: #{simple_mlp_silu_forward.1} parent=0 // pred_fallthru
    _
  // Predicated region
  $region66: #{simple_mlp_silu_forward.1} parent=0 // pred_check
    _
  $region67: #{simple_mlp_silu_forward.1} parent=0 // pred_check_branch
    %57 = sbr.rel (0) target = $region69
  $region68: #{simple_mlp_silu_forward.1} parent=0 // pred_region
    _
  $region69: #{simple_mlp_silu_forward.1} parent=0 // pred_fallthru
    _
  // Predicated region
  $region70: #{simple_mlp_silu_forward.1} parent=0 // pred_check
    _
  $region71: #{simple_mlp_silu_forward.1} parent=0 // pred_check_branch
    %59 = sbr.rel (0) target = $region73
  $region72: #{simple_mlp_silu_forward.1} parent=0 // pred_region
    _
  $region73: #{simple_mlp_silu_forward.1} parent=0 // pred_fallthru
    _
  // Predicated region
  $region74: #{simple_mlp_silu_forward.1} parent=0 // pred_check
    _
  $region75: #{simple_mlp_silu_forward.1} parent=0 // pred_check_branch
    %61 = sbr.rel (0) target = $region77
  $region76: #{simple_mlp_silu_forward.1} parent=0 // pred_region
    _
  $region77: #{simple_mlp_silu_forward.1} parent=0 // pred_fallthru
    _
  %v63 = vld [vmem:[%s0] sm:$0xff]
  %v64 = vld [vmem:[%s0 + $0x8] sm:$0xff]
  %v65 = vld [vmem:[%s0 + $0x10] sm:$0xff]
  %v66 = vld [vmem:[%s0 + $0x18] sm:$0xf]
  %v67 = vld [vmem:[%s0 + $0x1c] sm:$0xff]
  %v68 = vld [vmem:[%s0 + $0x24] sm:$0xff]
  %v69 = vld [vmem:[%s0 + $0x2c] sm:$0xff]
  %v70 = vld [vmem:[%s0 + $0x34] sm:$0xf]
  %v71 = vld [vmem:[%s1] sm:$0xf]
  %v72 = vld [vmem:[%s1 + $0x4] sm:$0xf]
  %v73 = vld [vmem:[%s1 + $0x8] sm:$0xf]
  %v74 = vld [vmem:[%s1 + $0xc] sm:$0xf]
  %v75 = vld [vmem:[%s1 + $0x10] sm:$0xf]
  %v76 = vld [vmem:[%s1 + $0x14] sm:$0xf]
  %v77 = vld [vmem:[%s1 + $0x18] sm:$0xf]
  %v78 = vld [vmem:[%s1 + $0x1c] sm:$0xf]
  %v79 = vld [vmem:[%s1 + $0x20] sm:$0xf]
  %v80 = vld [vmem:[%s1 + $0x24] sm:$0xf]
  %v81 = vld [vmem:[%s1 + $0x28] sm:$0xf]
  %v82 = vld [vmem:[%s1 + $0x2c] sm:$0xf]
  %v83 = vld [vmem:[%s1 + $0x30] sm:$0xf]
  %v84 = vld [vmem:[%s1 + $0x34] sm:$0xf]
  %v85 = vld [vmem:[%s1 + $0x38] sm:$0xf]
  %v86 = vld [vmem:[%s1 + $0x3c] sm:$0xf]
  %v87 = vld [vmem:[%s1 + $0x40] sm:$0xf]
  %v88 = vld [vmem:[%s1 + $0x44] sm:$0xf]
  %v89 = vld [vmem:[%s1 + $0x48] sm:$0xf]
  %v90 = vld [vmem:[%s1 + $0x4c] sm:$0xf]
  %v91 = vld [vmem:[%s1 + $0x50] sm:$0xf]
  %v92 = vld [vmem:[%s1 + $0x54] sm:$0xf]
  %v93 = vld [vmem:[%s1 + $0x58] sm:$0xf]
  %v94 = vld [vmem:[%s1 + $0x5c] sm:$0xf]
  %v95 = vld [vmem:[%s1 + $0x60] sm:$0xf]
  %v96 = vld [vmem:[%s1 + $0x64] sm:$0xf]
  %v97 = vld [vmem:[%s1 + $0x68] sm:$0xf]
  %v98 = vld [vmem:[%s1 + $0x6c] sm:$0xf]
  %v99 = vld [vmem:[%s1 + $0x70] sm:$0xf]
  %v100 = vld [vmem:[%s1 + $0x74] sm:$0xf]
  %v101 = vld [vmem:[%s1 + $0x78] sm:$0xf]
  %v102 = vld [vmem:[%s1 + $0x7c] sm:$0xf]
  %v103 = vld [vmem:[%s1 + $0x80] sm:$0xf]
  %v104 = vld [vmem:[%s1 + $0x84] sm:$0xf]
  %v105 = vld [vmem:[%s1 + $0x88] sm:$0xf]
  %v106 = vld [vmem:[%s1 + $0x8c] sm:$0xf]
  %v107 = vld [vmem:[%s1 + $0x90] sm:$0xf]
  %v108 = vld [vmem:[%s1 + $0x94] sm:$0xf]
  %v109 = vld [vmem:[%s1 + $0x98] sm:$0xf]
  %v110 = vld [vmem:[%s1 + $0x9c] sm:$0xf]
  %v111 = vld [vmem:[%s1 + $0xa0] sm:$0xf]
  %v112 = vld [vmem:[%s1 + $0xa4] sm:$0xf]
  %v113 = vld [vmem:[%s1 + $0xa8] sm:$0xf]
  %v114 = vld [vmem:[%s1 + $0xac] sm:$0xf]
  %v115 = vld [vmem:[%s1 + $0xb0] sm:$0xf]
  %v116 = vld [vmem:[%s1 + $0xb4] sm:$0xf]
  %v117 = vld [vmem:[%s1 + $0xb8] sm:$0xf]
  %v118 = vld [vmem:[%s1 + $0xbc] sm:$0xf]
  %v119 = vld [vmem:[%s1 + $0xc0] sm:$0xf]
  %v120 = vld [vmem:[%s1 + $0xc4] sm:$0xf]
  %v121 = vld [vmem:[%s1 + $0xc8] sm:$0xf]
  %v122 = vld [vmem:[%s1 + $0xcc] sm:$0xf]
  %v123 = vld [vmem:[%s1 + $0xd0] sm:$0xf]
  %v124 = vld [vmem:[%s1 + $0xd4] sm:$0xf]
  %v125 = vld [vmem:[%s1 + $0xd8] sm:$0xf]
  %v126 = vld [vmem:[%s1 + $0xdc] sm:$0xf]
  %v127 = vld [vmem:[%s1 + $0xe0] sm:$0xf]
  %v128 = vld [vmem:[%s1 + $0xe4] sm:$0xf]
  %v129 = vld [vmem:[%s1 + $0xe8] sm:$0xf]
  %v130 = vld [vmem:[%s1 + $0xec] sm:$0xf]
  %v131 = vld [vmem:[%s1 + $0xf0] sm:$0xf]
  %v132 = vld [vmem:[%s1 + $0xf4] sm:$0xf]
  %v133 = vld [vmem:[%s1 + $0xf8] sm:$0xf]
  %v134 = vld [vmem:[%s1 + $0xfc] sm:$0xf]
  %v135 = vld [vmem:[%s1 + $0x100] sm:$0xf]
  %v136 = vld [vmem:[%s1 + $0x104] sm:$0xf]
  %v137 = vld [vmem:[%s1 + $0x108] sm:$0xf]
  %v138 = vld [vmem:[%s1 + $0x10c] sm:$0xf]
  %v139 = vld [vmem:[%s1 + $0x110] sm:$0xf]
  %v140 = vld [vmem:[%s1 + $0x114] sm:$0xf]
  %v141 = vld [vmem:[%s1 + $0x118] sm:$0xf]
  %v142 = vld [vmem:[%s1 + $0x11c] sm:$0xf]
  %v143 = vld [vmem:[%s1 + $0x120] sm:$0xf]
  %v144 = vld [vmem:[%s1 + $0x124] sm:$0xf]
  %v145 = vld [vmem:[%s1 + $0x128] sm:$0xf]
  %v146 = vld [vmem:[%s1 + $0x12c] sm:$0xf]
  %v147 = vld [vmem:[%s1 + $0x130] sm:$0xf]
  %v148 = vld [vmem:[%s1 + $0x134] sm:$0xf]
  %v149 = vld [vmem:[%s1 + $0x138] sm:$0xf]
  %v150 = vld [vmem:[%s1 + $0x13c] sm:$0xf]
  %v151 = vld [vmem:[%s1 + $0x140] sm:$0xf]
  %v152 = vld [vmem:[%s1 + $0x144] sm:$0xf]
  %v153 = vld [vmem:[%s1 + $0x148] sm:$0xf]
  %v154 = vld [vmem:[%s1 + $0x14c] sm:$0xf]
  %v155 = vld [vmem:[%s1 + $0x150] sm:$0xf]
  %v156 = vld [vmem:[%s1 + $0x154] sm:$0xf]
  %v157 = vld [vmem:[%s1 + $0x158] sm:$0xf]
  %v158 = vld [vmem:[%s1 + $0x15c] sm:$0xf]
  %v159 = vld [vmem:[%s1 + $0x160] sm:$0xf]
  %v160 = vld [vmem:[%s1 + $0x164] sm:$0xf]
  %v161 = vld [vmem:[%s1 + $0x168] sm:$0xf]
  %v162 = vld [vmem:[%s1 + $0x16c] sm:$0xf]
  %v163 = vld [vmem:[%s1 + $0x170] sm:$0xf]
  %v164 = vld [vmem:[%s1 + $0x174] sm:$0xf]
  %v165 = vld [vmem:[%s1 + $0x178] sm:$0xf]
  %v166 = vld [vmem:[%s1 + $0x17c] sm:$0xf]
  %v167 = vld [vmem:[%s1 + $0x180] sm:$0xf]
  %v168 = vld [vmem:[%s1 + $0x184] sm:$0xf]
  %v169 = vld [vmem:[%s1 + $0x188] sm:$0xf]
  %v170 = vld [vmem:[%s1 + $0x18c] sm:$0xf]
  %v171 = vld [vmem:[%s1 + $0x190] sm:$0xf]
  %v172 = vld [vmem:[%s1 + $0x194] sm:$0xf]
  %v173 = vld [vmem:[%s1 + $0x198] sm:$0xf]
  %v174 = vld [vmem:[%s1 + $0x19c] sm:$0xf]
  %v175 = vld [vmem:[%s1 + $0x1a0] sm:$0xf]
  %v176 = vld [vmem:[%s1 + $0x1a4] sm:$0xf]
  %v177 = vld [vmem:[%s1 + $0x1a8] sm:$0xf]
  %v178 = vld [vmem:[%s1 + $0x1ac] sm:$0xf]
  %v179 = vld [vmem:[%s1 + $0x1b0] sm:$0xf]
  %v180 = vld [vmem:[%s1 + $0x1b4] sm:$0xf]
  %v181 = vld [vmem:[%s1 + $0x1b8] sm:$0xf]
  %v182 = vld [vmem:[%s1 + $0x1bc] sm:$0xf]
  %v183 = vld [vmem:[%s2] sm:$0x1]
  %v185 = vlaneseq
  %v186 = vshrl.u32 %v185, 7
  %v187 = vsub.s32 0, %v186
  %v188 = vrot.slane %v183, %v187
  %v198 = vunpack.c.l.b16 %v63
  %v199 = vunpack.c.h.b16 %v63
  %v200 = vunpack.c.l.b16 %v64
  %v201 = vunpack.c.h.b16 %v64
  %v202 = vunpack.c.l.b16 %v65
  %v203 = vunpack.c.h.b16 %v65
  %v204 = vunpack.c.l.b16 %v66
  %v205 = vunpack.c.l.b16 %v67
  %v206 = vunpack.c.h.b16 %v67
  %v207 = vunpack.c.l.b16 %v68
  %v208 = vunpack.c.h.b16 %v68
  %v209 = vunpack.c.l.b16 %v69
  %v210 = vunpack.c.h.b16 %v69
  %v211 = vunpack.c.l.b16 %v70
  %v212 = vpack.c.b16 %v205, %v198
  %v213 = vpack.c.b16 %v206, %v199
  %v214 = vpack.c.b16 %v207, %v200
  %v215 = vpack.c.b16 %v208, %v201
  %v216 = vpack.c.b16 %v209, %v202
  %v217 = vpack.c.b16 %v210, %v203
  %v218 = vpack.c.b16 %v211, %v204
  %v338 = vunpack.c.l.b16 %v71
  %v339 = vunpack.c.l.b16 %v72
  %v340 = vunpack.c.l.b16 %v73
  %v341 = vunpack.c.l.b16 %v74
  %v342 = vunpack.c.l.b16 %v75
  %v343 = vunpack.c.l.b16 %v76
  %v344 = vunpack.c.l.b16 %v77
  %v345 = vunpack.c.l.b16 %v78
  %v346 = vunpack.c.l.b16 %v79
  %v347 = vunpack.c.l.b16 %v80
  %v348 = vunpack.c.l.b16 %v81
  %v349 = vunpack.c.l.b16 %v82
  %v350 = vunpack.c.l.b16 %v83
  %v351 = vunpack.c.l.b16 %v84
  %v352 = vunpack.c.l.b16 %v85
  %v353 = vunpack.c.l.b16 %v86
  %v354 = vunpack.c.l.b16 %v87
  %v355 = vunpack.c.l.b16 %v88
  %v356 = vunpack.c.l.b16 %v89
  %v357 = vunpack.c.l.b16 %v90
  %v358 = vunpack.c.l.b16 %v91
  %v359 = vunpack.c.l.b16 %v92
  %v360 = vunpack.c.l.b16 %v93
  %v361 = vunpack.c.l.b16 %v94
  %v362 = vunpack.c.l.b16 %v95
  %v363 = vunpack.c.l.b16 %v96
  %v364 = vunpack.c.l.b16 %v97
  %v365 = vunpack.c.l.b16 %v98
  %v366 = vunpack.c.l.b16 %v99
  %v367 = vunpack.c.l.b16 %v100
  %v368 = vunpack.c.l.b16 %v101
  %v369 = vunpack.c.l.b16 %v102
  %v370 = vunpack.c.l.b16 %v103
  %v371 = vunpack.c.l.b16 %v104
  %v372 = vunpack.c.l.b16 %v105
  %v373 = vunpack.c.l.b16 %v106
  %v374 = vunpack.c.l.b16 %v107
  %v375 = vunpack.c.l.b16 %v108
  %v376 = vunpack.c.l.b16 %v109
  %v377 = vunpack.c.l.b16 %v110
  %v378 = vunpack.c.l.b16 %v111
  %v379 = vunpack.c.l.b16 %v112
  %v380 = vunpack.c.l.b16 %v113
  %v381 = vunpack.c.l.b16 %v114
  %v382 = vunpack.c.l.b16 %v115
  %v383 = vunpack.c.l.b16 %v116
  %v384 = vunpack.c.l.b16 %v117
  %v385 = vunpack.c.l.b16 %v118
  %v386 = vunpack.c.l.b16 %v119
  %v387 = vunpack.c.l.b16 %v120
  %v388 = vunpack.c.l.b16 %v121
  %v389 = vunpack.c.l.b16 %v122
  %v390 = vunpack.c.l.b16 %v123
  %v391 = vunpack.c.l.b16 %v124
  %v392 = vunpack.c.l.b16 %v125
  %v393 = vunpack.c.l.b16 %v126
  %v394 = vunpack.c.l.b16 %v127
  %v395 = vunpack.c.l.b16 %v128
  %v396 = vunpack.c.l.b16 %v129
  %v397 = vunpack.c.l.b16 %v130
  %v398 = vunpack.c.l.b16 %v131
  %v399 = vunpack.c.l.b16 %v132
  %v400 = vunpack.c.l.b16 %v133
  %v401 = vunpack.c.l.b16 %v134
  %v402 = vunpack.c.l.b16 %v135
  %v403 = vunpack.c.l.b16 %v136
  %v404 = vunpack.c.l.b16 %v137
  %v405 = vunpack.c.l.b16 %v138
  %v406 = vunpack.c.l.b16 %v139
  %v407 = vunpack.c.l.b16 %v140
  %v408 = vunpack.c.l.b16 %v141
  %v409 = vunpack.c.l.b16 %v142
  %v410 = vunpack.c.l.b16 %v143
  %v411 = vunpack.c.l.b16 %v144
  %v412 = vunpack.c.l.b16 %v145
  %v413 = vunpack.c.l.b16 %v146
  %v414 = vunpack.c.l.b16 %v147
  %v415 = vunpack.c.l.b16 %v148
  %v416 = vunpack.c.l.b16 %v149
  %v417 = vunpack.c.l.b16 %v150
  %v418 = vunpack.c.l.b16 %v151
  %v419 = vunpack.c.l.b16 %v152
  %v420 = vunpack.c.l.b16 %v153
  %v421 = vunpack.c.l.b16 %v154
  %v422 = vunpack.c.l.b16 %v155
  %v423 = vunpack.c.l.b16 %v156
  %v424 = vunpack.c.l.b16 %v157
  %v425 = vunpack.c.l.b16 %v158
  %v426 = vunpack.c.l.b16 %v159
  %v427 = vunpack.c.l.b16 %v160
  %v428 = vunpack.c.l.b16 %v161
  %v429 = vunpack.c.l.b16 %v162
  %v430 = vunpack.c.l.b16 %v163
  %v431 = vunpack.c.l.b16 %v164
  %v432 = vunpack.c.l.b16 %v165
  %v433 = vunpack.c.l.b16 %v166
  %v434 = vunpack.c.l.b16 %v167
  %v435 = vunpack.c.l.b16 %v168
  %v436 = vunpack.c.l.b16 %v169
  %v437 = vunpack.c.l.b16 %v170
  %v438 = vunpack.c.l.b16 %v171
  %v439 = vunpack.c.l.b16 %v172
  %v440 = vunpack.c.l.b16 %v173
  %v441 = vunpack.c.l.b16 %v174
  %v442 = vunpack.c.l.b16 %v175
  %v443 = vunpack.c.l.b16 %v176
  %v444 = vunpack.c.l.b16 %v177
  %v445 = vunpack.c.l.b16 %v178
  %v446 = vunpack.c.l.b16 %v179
  %v447 = vunpack.c.l.b16 %v180
  %v448 = vunpack.c.l.b16 %v181
  %v449 = vunpack.c.l.b16 %v182
  %v450 = vpack.c.b16 %v339, %v338
  %v451 = vpack.c.b16 %v341, %v340
  %v452 = vpack.c.b16 %v343, %v342
  %v453 = vpack.c.b16 %v345, %v344
  %v454 = vpack.c.b16 %v347, %v346
  %v455 = vpack.c.b16 %v349, %v348
  %v456 = vpack.c.b16 %v351, %v350
  %v457 = vpack.c.b16 %v353, %v352
  %v458 = vpack.c.b16 %v355, %v354
  %v459 = vpack.c.b16 %v357, %v356
  %v460 = vpack.c.b16 %v359, %v358
  %v461 = vpack.c.b16 %v361, %v360
  %v462 = vpack.c.b16 %v363, %v362
  %v463 = vpack.c.b16 %v365, %v364
  %v464 = vpack.c.b16 %v367, %v366
  %v465 = vpack.c.b16 %v369, %v368
  %v466 = vpack.c.b16 %v371, %v370
  %v467 = vpack.c.b16 %v373, %v372
  %v468 = vpack.c.b16 %v375, %v374
  %v469 = vpack.c.b16 %v377, %v376
  %v470 = vpack.c.b16 %v379, %v378
  %v471 = vpack.c.b16 %v381, %v380
  %v472 = vpack.c.b16 %v383, %v382
  %v473 = vpack.c.b16 %v385, %v384
  %v474 = vpack.c.b16 %v387, %v386
  %v475 = vpack.c.b16 %v389, %v388
  %v476 = vpack.c.b16 %v391, %v390
  %v477 = vpack.c.b16 %v393, %v392
  %v478 = vpack.c.b16 %v395, %v394
  %v479 = vpack.c.b16 %v397, %v396
  %v480 = vpack.c.b16 %v399, %v398
  %v481 = vpack.c.b16 %v401, %v400
  %v482 = vpack.c.b16 %v403, %v402
  %v483 = vpack.c.b16 %v405, %v404
  %v484 = vpack.c.b16 %v407, %v406
  %v485 = vpack.c.b16 %v409, %v408
  %v486 = vpack.c.b16 %v411, %v410
  %v487 = vpack.c.b16 %v413, %v412
  %v488 = vpack.c.b16 %v415, %v414
  %v489 = vpack.c.b16 %v417, %v416
  %v490 = vpack.c.b16 %v419, %v418
  %v491 = vpack.c.b16 %v421, %v420
  %v492 = vpack.c.b16 %v423, %v422
  %v493 = vpack.c.b16 %v425, %v424
  %v494 = vpack.c.b16 %v427, %v426
  %v495 = vpack.c.b16 %v429, %v428
  %v496 = vpack.c.b16 %v431, %v430
  %v497 = vpack.c.b16 %v433, %v432
  %v498 = vpack.c.b16 %v435, %v434
  %v499 = vpack.c.b16 %v437, %v436
  %v500 = vpack.c.b16 %v439, %v438
  %v501 = vpack.c.b16 %v441, %v440
  %v502 = vpack.c.b16 %v443, %v442
  %v503 = vpack.c.b16 %v445, %v444
  %v504 = vpack.c.b16 %v447, %v446
  %v505 = vpack.c.b16 %v449, %v448
  %562 = vmatprep.subr.bf16.mxu0 0
  %563 = vmatpush1.bf16.msra.mxu0 %v450
  %564 = vmatprep.subr.bf16.mxu0 0
  %565 = vmatpush1.bf16.msra.mxu0 %v451
  %566 = vmatprep.subr.bf16.mxu0 0
  %567 = vmatpush1.bf16.msra.mxu0 %v452
  %568 = vmatprep.subr.bf16.mxu0 0
  %569 = vmatpush1.bf16.msra.mxu0 %v453
  %570 = vmatprep.subr.bf16.mxu0 0
  %571 = vmatpush1.bf16.msra.mxu0 %v454
  %572 = vmatprep.subr.bf16.mxu0 0
  %573 = vmatpush1.bf16.msra.mxu0 %v455
  %574 = vmatprep.subr.bf16.mxu0 0
  %575 = vmatpush1.bf16.msra.mxu0 %v456
  %576 = vmatprep.subr.bf16.mxu0 0
  %577 = vmatpush1.bf16.msra.mxu0 %v457
  %578 = vmatprep.subr.bf16.mxu0 0
  %579 = vmatpush1.bf16.msra.mxu0 %v458
  %580 = vmatprep.subr.bf16.mxu0 0
  %581 = vmatpush1.bf16.msra.mxu0 %v459
  %582 = vmatprep.subr.bf16.mxu0 0
  %583 = vmatpush1.bf16.msra.mxu0 %v460
  %584 = vmatprep.subr.bf16.mxu0 0
  %585 = vmatpush1.bf16.msra.mxu0 %v461
  %586 = vmatprep.subr.bf16.mxu0 0
  %587 = vmatpush1.bf16.msra.mxu0 %v462
  %588 = vmatprep.subr.bf16.mxu0 0
  %589 = vmatpush1.bf16.msra.mxu0 %v463
  %590 = vmatprep.subr.bf16.mxu0 0
  %591 = vmatpush1.bf16.msra.mxu0 %v464
  %592 = vmatprep.subr.bf16.mxu0 0
  %593 = vmatpush1.bf16.msra.mxu0 %v465
  %594 = vmatprep.mubr.bf16.mxu0 %v213
  %595 = vmatmul.mubr.bf16.gmra.mrb[0].mxu0 %v212
  %v596 = vpop.f32.mrb[0].mxu0
  %v597 = vadd.f32 %v188, %v596
  %v598 = vpop.f32.mrb[0].mxu0
  %v599 = vpop.f32.mrb[0].mxu0
  %v600 = vadd.f32 %v188, %v599
  %v601 = vpop.f32.mrb[0].mxu0
  %602 = vdwg.mxu0
  %603 = vmatprep.subr.bf16.mxu0 0
  %604 = vmatpush1.bf16.msra.mxu0 %v466
  %605 = vmatprep.subr.bf16.mxu0 0
  %606 = vmatpush1.bf16.msra.mxu0 %v467
  %607 = vmatprep.subr.bf16.mxu0 0
  %608 = vmatpush1.bf16.msra.mxu0 %v468
  %609 = vmatprep.subr.bf16.mxu0 0
  %610 = vmatpush1.bf16.msra.mxu0 %v469
  %611 = vmatprep.subr.bf16.mxu0 0
  %612 = vmatpush1.bf16.msra.mxu0 %v470
  %613 = vmatprep.subr.bf16.mxu0 0
  %614 = vmatpush1.bf16.msra.mxu0 %v471
  %615 = vmatprep.subr.bf16.mxu0 0
  %616 = vmatpush1.bf16.msra.mxu0 %v472
  %617 = vmatprep.subr.bf16.mxu0 0
  %618 = vmatpush1.bf16.msra.mxu0 %v473
  %619 = vmatprep.subr.bf16.mxu0 0
  %620 = vmatpush1.bf16.msra.mxu0 %v474
  %621 = vmatprep.subr.bf16.mxu0 0
  %622 = vmatpush1.bf16.msra.mxu0 %v475
  %623 = vmatprep.subr.bf16.mxu0 0
  %624 = vmatpush1.bf16.msra.mxu0 %v476
  %625 = vmatprep.subr.bf16.mxu0 0
  %626 = vmatpush1.bf16.msra.mxu0 %v477
  %627 = vmatprep.subr.bf16.mxu0 0
  %628 = vmatpush1.bf16.msra.mxu0 %v478
  %629 = vmatprep.subr.bf16.mxu0 0
  %630 = vmatpush1.bf16.msra.mxu0 %v479
  %631 = vmatprep.subr.bf16.mxu0 0
  %632 = vmatpush1.bf16.msra.mxu0 %v480
  %633 = vmatprep.subr.bf16.mxu0 0
  %634 = vmatpush1.bf16.msra.mxu0 %v481
  %635 = vmatprep.mubr.bf16.mxu0 %v215
  %636 = vmatmul.mubr.bf16.gmra.mrb[0].mxu0 %v214
  %v637 = vpop.f32.mrb[0].mxu0
  %v638 = vadd.f32 %v597, %v637
  %v639 = vpop.f32.mrb[0].mxu0
  %v640 = vpop.f32.mrb[0].mxu0
  %v641 = vadd.f32 %v600, %v640
  %v642 = vpop.f32.mrb[0].mxu0
  %643 = vdwg.mxu0
  %644 = vmatprep.subr.bf16.mxu0 0
  %645 = vmatpush1.bf16.msra.mxu0 %v482
  %646 = vmatprep.subr.bf16.mxu0 0
  %647 = vmatpush1.bf16.msra.mxu0 %v483
  %648 = vmatprep.subr.bf16.mxu0 0
  %649 = vmatpush1.bf16.msra.mxu0 %v484
  %650 = vmatprep.subr.bf16.mxu0 0
  %651 = vmatpush1.bf16.msra.mxu0 %v485
  %652 = vmatprep.subr.bf16.mxu0 0
  %653 = vmatpush1.bf16.msra.mxu0 %v486
  %654 = vmatprep.subr.bf16.mxu0 0
  %655 = vmatpush1.bf16.msra.mxu0 %v487
  %656 = vmatprep.subr.bf16.mxu0 0
  %657 = vmatpush1.bf16.msra.mxu0 %v488
  %658 = vmatprep.subr.bf16.mxu0 0
  %659 = vmatpush1.bf16.msra.mxu0 %v489
  %660 = vmatprep.subr.bf16.mxu0 0
  %661 = vmatpush1.bf16.msra.mxu0 %v490
  %662 = vmatprep.subr.bf16.mxu0 0
  %663 = vmatpush1.bf16.msra.mxu0 %v491
  %664 = vmatprep.subr.bf16.mxu0 0
  %665 = vmatpush1.bf16.msra.mxu0 %v492
  %666 = vmatprep.subr.bf16.mxu0 0
  %667 = vmatpush1.bf16.msra.mxu0 %v493
  %668 = vmatprep.subr.bf16.mxu0 0
  %669 = vmatpush1.bf16.msra.mxu0 %v494
  %670 = vmatprep.subr.bf16.mxu0 0
  %671 = vmatpush1.bf16.msra.mxu0 %v495
  %672 = vmatprep.subr.bf16.mxu0 0
  %673 = vmatpush1.bf16.msra.mxu0 %v496
  %674 = vmatprep.subr.bf16.mxu0 0
  %675 = vmatpush1.bf16.msra.mxu0 %v497
  %676 = vmatprep.mubr.bf16.mxu0 %v217
  %677 = vmatmul.mubr.bf16.gmra.mrb[0].mxu0 %v216
  %v678 = vpop.f32.mrb[0].mxu0
  %v679 = vadd.f32 %v638, %v678
  %v680 = vpop.f32.mrb[0].mxu0
  %v681 = vpop.f32.mrb[0].mxu0
  %v682 = vadd.f32 %v641, %v681
  %v683 = vpop.f32.mrb[0].mxu0
  %684 = vdwg.mxu0
  %685 = vmatprep.subr.bf16.mxu0 0
  %686 = vmatpush1.bf16.msra.mxu0 %v498
  %687 = vmatprep.subr.bf16.mxu0 0
  %688 = vmatpush1.bf16.msra.mxu0 %v499
  %689 = vmatprep.subr.bf16.mxu0 0
  %690 = vmatpush1.bf16.msra.mxu0 %v500
  %691 = vmatprep.subr.bf16.mxu0 0
  %692 = vmatpush1.bf16.msra.mxu0 %v501
  %693 = vmatprep.subr.bf16.mxu0 0
  %694 = vmatpush1.bf16.msra.mxu0 %v502
  %695 = vmatprep.subr.bf16.mxu0 0
  %696 = vmatpush1.bf16.msra.mxu0 %v503
  %697 = vmatprep.subr.bf16.mxu0 0
  %698 = vmatpush1.bf16.msra.mxu0 %v504
  %699 = vmatprep.subr.bf16.mxu0 0
  %700 = vmatpush1.bf16.msra.mxu0 %v505
  %701 = vmatprep.subr.bf16.mxu0 0
  %702 = vmatpush1.bf16.msra.mxu0 0
  %703 = vmatprep.subr.bf16.mxu0 0
  %704 = vmatpush1.bf16.msra.mxu0 0
  %705 = vmatprep.subr.bf16.mxu0 0
  %706 = vmatpush1.bf16.msra.mxu0 0
  %707 = vmatprep.subr.bf16.mxu0 0
  %708 = vmatpush1.bf16.msra.mxu0 0
  %709 = vmatprep.subr.bf16.mxu0 0
  %710 = vmatpush1.bf16.msra.mxu0 0
  %711 = vmatprep.subr.bf16.mxu0 0
  %712 = vmatpush1.bf16.msra.mxu0 0
  %713 = vmatprep.subr.bf16.mxu0 0
  %714 = vmatpush1.bf16.msra.mxu0 0
  %715 = vmatprep.subr.bf16.mxu0 0
  %716 = vmatpush1.bf16.msra.mxu0 0
  %717 = vmatprep.mubr.bf16.mxu0 0
  %718 = vmatmul.mubr.bf16.gmra.mrb[0].mxu0 %v218
  %v719 = vpop.f32.mrb[0].mxu0
  %v720 = vadd.f32 %v679, %v719
  %v721 = vpop.f32.mrb[0].mxu0
  %v722 = vpop.f32.mrb[0].mxu0
  %v723 = vadd.f32 %v682, %v722
  %v724 = vpop.f32.mrb[0].mxu0
  %725 = vdwg.mxu0
  %v726 = vxor.u32 %v720, 2147483648
  %v727 = vxor.u32 %v723, 2147483648
  %v728 = vmul.f32 %v726, 1.442695
  %v729 = vpow.pop %v728
  %v730 = vmul.f32 %v727, 1.442695
  %v731 = vpow.pop %v730
  %v732 = vadd.f32 %v729, 1.0
  %v733 = vadd.f32 %v731, 1.0
  %v734 = vrcp.pop %v732
  %v735 = vmul.f32 1.0, %v734
  %v736 = vrcp.pop %v733
  %v737 = vmul.f32 1.0, %v736
  %v738 = vmul.f32 %v720, %v735
  %v739 = vmul.f32 %v723, %v737
  %v740 = vpack.c.bf16 %v739, %v738
  %v741 = vld [vmem:[%s3] sm:$0xf]
  %v742 = vld [vmem:[%s3 + $0x4] sm:$0xf]
  %v743 = vld [vmem:[%s3 + $0x8] sm:$0xf]
  %v744 = vld [vmem:[%s3 + $0xc] sm:$0xf]
  %v745 = vld [vmem:[%s3 + $0x10] sm:$0xf]
  %v746 = vld [vmem:[%s3 + $0x14] sm:$0xf]
  %v747 = vld [vmem:[%s3 + $0x18] sm:$0xf]
  %v748 = vld [vmem:[%s3 + $0x1c] sm:$0xf]
  %v749 = vld [vmem:[%s3 + $0x20] sm:$0xf]
  %v750 = vld [vmem:[%s3 + $0x24] sm:$0xf]
  %v751 = vld [vmem:[%s3 + $0x28] sm:$0xf]
  %v752 = vld [vmem:[%s3 + $0x2c] sm:$0xf]
  %v753 = vld [vmem:[%s3 + $0x30] sm:$0xf]
  %v754 = vld [vmem:[%s3 + $0x34] sm:$0xf]
  %v755 = vld [vmem:[%s3 + $0x38] sm:$0xf]
  %v756 = vld [vmem:[%s3 + $0x3c] sm:$0xf]
  %v757 = vld [vmem:[%s4] sm:$0x1]
  %v759 = vlaneseq
  %v760 = vshrl.u32 %v759, 7
  %v761 = vsub.s32 0, %v760
  %v762 = vrot.slane %v757, %v761
  %v780 = vunpack.c.l.b16 %v741
  %v781 = vunpack.c.l.b16 %v742
  %v782 = vunpack.c.l.b16 %v743
  %v783 = vunpack.c.l.b16 %v744
  %v784 = vunpack.c.l.b16 %v745
  %v785 = vunpack.c.l.b16 %v746
  %v786 = vunpack.c.l.b16 %v747
  %v787 = vunpack.c.l.b16 %v748
  %v788 = vunpack.c.l.b16 %v749
  %v789 = vunpack.c.l.b16 %v750
  %v790 = vunpack.c.l.b16 %v751
  %v791 = vunpack.c.l.b16 %v752
  %v792 = vunpack.c.l.b16 %v753
  %v793 = vunpack.c.l.b16 %v754
  %v794 = vunpack.c.l.b16 %v755
  %v795 = vunpack.c.l.b16 %v756
  %v796 = vpack.c.b16 %v781, %v780
  %v797 = vpack.c.b16 %v783, %v782
  %v798 = vpack.c.b16 %v785, %v784
  %v799 = vpack.c.b16 %v787, %v786
  %v800 = vpack.c.b16 %v789, %v788
  %v801 = vpack.c.b16 %v791, %v790
  %v802 = vpack.c.b16 %v793, %v792
  %v803 = vpack.c.b16 %v795, %v794
  %812 = vmatprep.subr.bf16.mxu0 0
  %813 = vmatpush1.bf16.msra.mxu0 %v796
  %814 = vmatprep.subr.bf16.mxu0 0
  %815 = vmatpush1.bf16.msra.mxu0 %v797
  %816 = vmatprep.subr.bf16.mxu0 0
  %817 = vmatpush1.bf16.msra.mxu0 %v798
  %818 = vmatprep.subr.bf16.mxu0 0
  %819 = vmatpush1.bf16.msra.mxu0 %v799
  %820 = vmatprep.subr.bf16.mxu0 0
  %821 = vmatpush1.bf16.msra.mxu0 %v800
  %822 = vmatprep.subr.bf16.mxu0 0
  %823 = vmatpush1.bf16.msra.mxu0 %v801
  %824 = vmatprep.subr.bf16.mxu0 0
  %825 = vmatpush1.bf16.msra.mxu0 %v802
  %826 = vmatprep.subr.bf16.mxu0 0
  %827 = vmatpush1.bf16.msra.mxu0 %v803
  %828 = vmatprep.subr.bf16.mxu0 0
  %829 = vmatpush1.bf16.msra.mxu0 0
  %830 = vmatprep.subr.bf16.mxu0 0
  %831 = vmatpush1.bf16.msra.mxu0 0
  %832 = vmatprep.subr.bf16.mxu0 0
  %833 = vmatpush1.bf16.msra.mxu0 0
  %834 = vmatprep.subr.bf16.mxu0 0
  %835 = vmatpush1.bf16.msra.mxu0 0
  %836 = vmatprep.subr.bf16.mxu0 0
  %837 = vmatpush1.bf16.msra.mxu0 0
  %838 = vmatprep.subr.bf16.mxu0 0
  %839 = vmatpush1.bf16.msra.mxu0 0
  %840 = vmatprep.subr.bf16.mxu0 0
  %841 = vmatpush1.bf16.msra.mxu0 0
  %842 = vmatprep.subr.bf16.mxu0 0
  %843 = vmatpush1.bf16.msra.mxu0 0
  %844 = vmatprep.mubr.bf16.mxu0 0
  %845 = vmatmul.mubr.bf16.gmra.mrb[0].mxu0 %v740
  %v846 = vpop.f32.mrb[0].mxu0
  %v847 = vadd.f32 %v762, %v846
  %v848 = vpop.f32.mrb[0].mxu0
  %v849 = vpop.f32.mrb[0].mxu0
  %v850 = vadd.f32 %v762, %v849
  %v851 = vpop.f32.mrb[0].mxu0
  %852 = vdwg.mxu0
  %v853 = vxor.u32 %v847, 2147483648
  %v854 = vxor.u32 %v850, 2147483648
  %v855 = vmul.f32 %v853, 1.442695
  %v856 = vpow.pop %v855
  %v857 = vmul.f32 %v854, 1.442695
  %v858 = vpow.pop %v857
  %v859 = vadd.f32 %v856, 1.0
  %v860 = vadd.f32 %v858, 1.0
  %v861 = vrcp.pop %v859
  %v862 = vmul.f32 1.0, %v861
  %v863 = vrcp.pop %v860
  %v864 = vmul.f32 1.0, %v863
  %v865 = vmul.f32 %v847, %v862
  %v866 = vmul.f32 %v850, %v864
  %v867 = vpack.c.bf16 %v866, %v865
  %v868 = vld [vmem:[%s5] sm:$0xf]
  %v869 = vld [vmem:[%s5 + $0x4] sm:$0xf]
  %v870 = vld [vmem:[%s5 + $0x8] sm:$0xf]
  %v871 = vld [vmem:[%s5 + $0xc] sm:$0xf]
  %v872 = vld [vmem:[%s5 + $0x10] sm:$0xf]
  %v873 = vld [vmem:[%s5 + $0x14] sm:$0xf]
  %v874 = vld [vmem:[%s5 + $0x18] sm:$0xf]
  %v875 = vld [vmem:[%s5 + $0x1c] sm:$0xf]
  %v876 = vld [vmem:[%s5 + $0x20] sm:$0xf]
  %v877 = vld [vmem:[%s5 + $0x24] sm:$0xf]
  %v878 = vld [vmem:[%s5 + $0x28] sm:$0xf]
  %v879 = vld [vmem:[%s5 + $0x2c] sm:$0xf]
  %v880 = vld [vmem:[%s5 + $0x30] sm:$0xf]
  %v881 = vld [vmem:[%s5 + $0x34] sm:$0xf]
  %v882 = vld [vmem:[%s5 + $0x38] sm:$0xf]
  %v883 = vld [vmem:[%s5 + $0x3c] sm:$0xf]
  %v884 = vld [vmem:[%s6] sm:$0x1]
  %v886 = vlaneseq
  %v887 = vshrl.u32 %v886, 7
  %v888 = vsub.s32 0, %v887
  %v889 = vrot.slane %v884, %v888
  %v907 = vunpack.c.l.b16 %v868
  %v908 = vunpack.c.l.b16 %v869
  %v909 = vunpack.c.l.b16 %v870
  %v910 = vunpack.c.l.b16 %v871
  %v911 = vunpack.c.l.b16 %v872
  %v912 = vunpack.c.l.b16 %v873
  %v913 = vunpack.c.l.b16 %v874
  %v914 = vunpack.c.l.b16 %v875
  %v915 = vunpack.c.l.b16 %v876
  %v916 = vunpack.c.l.b16 %v877
  %v917 = vunpack.c.l.b16 %v878
  %v918 = vunpack.c.l.b16 %v879
  %v919 = vunpack.c.l.b16 %v880
  %v920 = vunpack.c.l.b16 %v881
  %v921 = vunpack.c.l.b16 %v882
  %v922 = vunpack.c.l.b16 %v883
  %v923 = vpack.c.b16 %v908, %v907
  %v924 = vpack.c.b16 %v910, %v909
  %v925 = vpack.c.b16 %v912, %v911
  %v926 = vpack.c.b16 %v914, %v913
  %v927 = vpack.c.b16 %v916, %v915
  %v928 = vpack.c.b16 %v918, %v917
  %v929 = vpack.c.b16 %v920, %v919
  %v930 = vpack.c.b16 %v922, %v921
  %939 = vmatprep.subr.bf16.mxu0 0
  %940 = vmatpush1.bf16.msra.mxu0 %v923
  %941 = vmatprep.subr.bf16.mxu0 0
  %942 = vmatpush1.bf16.msra.mxu0 %v924
  %943 = vmatprep.subr.bf16.mxu0 0
  %944 = vmatpush1.bf16.msra.mxu0 %v925
  %945 = vmatprep.subr.bf16.mxu0 0
  %946 = vmatpush1.bf16.msra.mxu0 %v926
  %947 = vmatprep.subr.bf16.mxu0 0
  %948 = vmatpush1.bf16.msra.mxu0 %v927
  %949 = vmatprep.subr.bf16.mxu0 0
  %950 = vmatpush1.bf16.msra.mxu0 %v928
  %951 = vmatprep.subr.bf16.mxu0 0
  %952 = vmatpush1.bf16.msra.mxu0 %v929
  %953 = vmatprep.subr.bf16.mxu0 0
  %954 = vmatpush1.bf16.msra.mxu0 %v930
  %955 = vmatprep.subr.bf16.mxu0 0
  %956 = vmatpush1.bf16.msra.mxu0 0
  %957 = vmatprep.subr.bf16.mxu0 0
  %958 = vmatpush1.bf16.msra.mxu0 0
  %959 = vmatprep.subr.bf16.mxu0 0
  %960 = vmatpush1.bf16.msra.mxu0 0
  %961 = vmatprep.subr.bf16.mxu0 0
  %962 = vmatpush1.bf16.msra.mxu0 0
  %963 = vmatprep.subr.bf16.mxu0 0
  %964 = vmatpush1.bf16.msra.mxu0 0
  %965 = vmatprep.subr.bf16.mxu0 0
  %966 = vmatpush1.bf16.msra.mxu0 0
  %967 = vmatprep.subr.bf16.mxu0 0
  %968 = vmatpush1.bf16.msra.mxu0 0
  %969 = vmatprep.subr.bf16.mxu0 0
  %970 = vmatpush1.bf16.msra.mxu0 0
  %971 = vmatprep.mubr.bf16.mxu0 0
  %972 = vmatmul.mubr.bf16.gmra.mrb[0].mxu0 %v867
  %v973 = vpop.f32.mrb[0].mxu0
  %v974 = vadd.f32 %v889, %v973
  %v975 = vpop.f32.mrb[0].mxu0
  %v976 = vpop.f32.mrb[0].mxu0
  %v977 = vadd.f32 %v889, %v976
  %v978 = vpop.f32.mrb[0].mxu0
  %979 = vdwg.mxu0
  %v980 = vxor.u32 %v974, 2147483648
  %v981 = vxor.u32 %v977, 2147483648
  %v982 = vmul.f32 %v980, 1.442695
  %v983 = vpow.pop %v982
  %v984 = vmul.f32 %v981, 1.442695
  %v985 = vpow.pop %v984
  %v986 = vadd.f32 %v983, 1.0
  %v987 = vadd.f32 %v985, 1.0
  %v988 = vrcp.pop %v986
  %v989 = vmul.f32 1.0, %v988
  %v990 = vrcp.pop %v987
  %v991 = vmul.f32 1.0, %v990
  %v992 = vmul.f32 %v974, %v989
  %v993 = vmul.f32 %v977, %v991
  %v994 = vpack.c.bf16 %v993, %v992
  %v995 = vld [vmem:[%s7] sm:$0xf]
  %v996 = vld [vmem:[%s7 + $0x4] sm:$0xf]
  %v997 = vld [vmem:[%s7 + $0x8] sm:$0xf]
  %v998 = vld [vmem:[%s7 + $0xc] sm:$0xf]
  %v999 = vld [vmem:[%s7 + $0x10] sm:$0xf]
  %v1000 = vld [vmem:[%s7 + $0x14] sm:$0xf]
  %v1001 = vld [vmem:[%s7 + $0x18] sm:$0xf]
  %v1002 = vld [vmem:[%s7 + $0x1c] sm:$0xf]
  %v1003 = vld [vmem:[%s7 + $0x20] sm:$0xf]
  %v1004 = vld [vmem:[%s7 + $0x24] sm:$0xf]
  %v1005 = vld [vmem:[%s7 + $0x28] sm:$0xf]
  %v1006 = vld [vmem:[%s7 + $0x2c] sm:$0xf]
  %v1007 = vld [vmem:[%s7 + $0x30] sm:$0xf]
  %v1008 = vld [vmem:[%s7 + $0x34] sm:$0xf]
  %v1009 = vld [vmem:[%s7 + $0x38] sm:$0xf]
  %v1010 = vld [vmem:[%s7 + $0x3c] sm:$0xf]
  %v1011 = vld [vmem:[%s8] sm:$0x1]
  %v1013 = vlaneseq
  %v1014 = vshrl.u32 %v1013, 7
  %v1015 = vsub.s32 0, %v1014
  %v1016 = vrot.slane %v1011, %v1015
  %v1034 = vunpack.c.l.b16 %v995
  %v1035 = vunpack.c.l.b16 %v996
  %v1036 = vunpack.c.l.b16 %v997
  %v1037 = vunpack.c.l.b16 %v998
  %v1038 = vunpack.c.l.b16 %v999
  %v1039 = vunpack.c.l.b16 %v1000
  %v1040 = vunpack.c.l.b16 %v1001
  %v1041 = vunpack.c.l.b16 %v1002
  %v1042 = vunpack.c.l.b16 %v1003
  %v1043 = vunpack.c.l.b16 %v1004
  %v1044 = vunpack.c.l.b16 %v1005
  %v1045 = vunpack.c.l.b16 %v1006
  %v1046 = vunpack.c.l.b16 %v1007
  %v1047 = vunpack.c.l.b16 %v1008
  %v1048 = vunpack.c.l.b16 %v1009
  %v1049 = vunpack.c.l.b16 %v1010
  %v1050 = vpack.c.b16 %v1035, %v1034
  %v1051 = vpack.c.b16 %v1037, %v1036
  %v1052 = vpack.c.b16 %v1039, %v1038
  %v1053 = vpack.c.b16 %v1041, %v1040
  %v1054 = vpack.c.b16 %v1043, %v1042
  %v1055 = vpack.c.b16 %v1045, %v1044
  %v1056 = vpack.c.b16 %v1047, %v1046
  %v1057 = vpack.c.b16 %v1049, %v1048
  %1066 = vmatprep.subr.bf16.mxu0 0
  %1067 = vmatpush1.bf16.msra.mxu0 %v1050
  %1068 = vmatprep.subr.bf16.mxu0 0
  %1069 = vmatpush1.bf16.msra.mxu0 %v1051
  %1070 = vmatprep.subr.bf16.mxu0 0
  %1071 = vmatpush1.bf16.msra.mxu0 %v1052
  %1072 = vmatprep.subr.bf16.mxu0 0
  %1073 = vmatpush1.bf16.msra.mxu0 %v1053
  %1074 = vmatprep.subr.bf16.mxu0 0
  %1075 = vmatpush1.bf16.msra.mxu0 %v1054
  %1076 = vmatprep.subr.bf16.mxu0 0
  %1077 = vmatpush1.bf16.msra.mxu0 %v1055
  %1078 = vmatprep.subr.bf16.mxu0 0
  %1079 = vmatpush1.bf16.msra.mxu0 %v1056
  %1080 = vmatprep.subr.bf16.mxu0 0
  %1081 = vmatpush1.bf16.msra.mxu0 %v1057
  %1082 = vmatprep.subr.bf16.mxu0 0
  %1083 = vmatpush1.bf16.msra.mxu0 0
  %1084 = vmatprep.subr.bf16.mxu0 0
  %1085 = vmatpush1.bf16.msra.mxu0 0
  %1086 = vmatprep.subr.bf16.mxu0 0
  %1087 = vmatpush1.bf16.msra.mxu0 0
  %1088 = vmatprep.subr.bf16.mxu0 0
  %1089 = vmatpush1.bf16.msra.mxu0 0
  %1090 = vmatprep.subr.bf16.mxu0 0
  %1091 = vmatpush1.bf16.msra.mxu0 0
  %1092 = vmatprep.subr.bf16.mxu0 0
  %1093 = vmatpush1.bf16.msra.mxu0 0
  %1094 = vmatprep.subr.bf16.mxu0 0
  %1095 = vmatpush1.bf16.msra.mxu0 0
  %1096 = vmatprep.subr.bf16.mxu0 0
  %1097 = vmatpush1.bf16.msra.mxu0 0
  %1098 = vmatprep.mubr.bf16.mxu0 0
  %1099 = vmatmul.mubr.bf16.gmra.mrb[0].mxu0 %v994
  %v1100 = vpop.f32.mrb[0].mxu0
  %v1101 = vadd.f32 %v1016, %v1100
  %v1102 = vpop.f32.mrb[0].mxu0
  %v1103 = vpop.f32.mrb[0].mxu0
  %v1104 = vadd.f32 %v1016, %v1103
  %v1105 = vpop.f32.mrb[0].mxu0
  %1106 = vdwg.mxu0
  %v1107 = vxor.u32 %v1101, 2147483648
  %v1108 = vxor.u32 %v1104, 2147483648
  %v1109 = vmul.f32 %v1107, 1.442695
  %v1110 = vpow.pop %v1109
  %v1111 = vmul.f32 %v1108, 1.442695
  %v1112 = vpow.pop %v1111
  %v1113 = vadd.f32 %v1110, 1.0
  %v1114 = vadd.f32 %v1112, 1.0
  %v1115 = vrcp.pop %v1113
  %v1116 = vmul.f32 1.0, %v1115
  %v1117 = vrcp.pop %v1114
  %v1118 = vmul.f32 1.0, %v1117
  %v1119 = vmul.f32 %v1101, %v1116
  %v1120 = vmul.f32 %v1104, %v1118
  %v1121 = vpack.c.bf16 %v1120, %v1119
  %v1122 = vld [vmem:[%s9] sm:$0xf]
  %v1123 = vld [vmem:[%s9 + $0x4] sm:$0xf]
  %v1124 = vld [vmem:[%s9 + $0x8] sm:$0xf]
  %v1125 = vld [vmem:[%s9 + $0xc] sm:$0xf]
  %v1126 = vld [vmem:[%s9 + $0x10] sm:$0xf]
  %v1127 = vld [vmem:[%s9 + $0x14] sm:$0xf]
  %v1128 = vld [vmem:[%s9 + $0x18] sm:$0xf]
  %v1129 = vld [vmem:[%s9 + $0x1c] sm:$0xf]
  %v1130 = vld [vmem:[%s9 + $0x20] sm:$0xf]
  %v1131 = vld [vmem:[%s9 + $0x24] sm:$0xf]
  %v1132 = vld [vmem:[%s9 + $0x28] sm:$0xf]
  %v1133 = vld [vmem:[%s9 + $0x2c] sm:$0xf]
  %v1134 = vld [vmem:[%s9 + $0x30] sm:$0xf]
  %v1135 = vld [vmem:[%s9 + $0x34] sm:$0xf]
  %v1136 = vld [vmem:[%s9 + $0x38] sm:$0xf]
  %v1137 = vld [vmem:[%s9 + $0x3c] sm:$0xf]
  %v1138 = vld [vmem:[%s10] sm:$0x1]
  %v1140 = vlaneseq
  %v1141 = vshrl.u32 %v1140, 7
  %v1142 = vsub.s32 0, %v1141
  %v1143 = vrot.slane %v1138, %v1142
  %v1161 = vunpack.c.l.b16 %v1122
  %v1162 = vunpack.c.l.b16 %v1123
  %v1163 = vunpack.c.l.b16 %v1124
  %v1164 = vunpack.c.l.b16 %v1125
  %v1165 = vunpack.c.l.b16 %v1126
  %v1166 = vunpack.c.l.b16 %v1127
  %v1167 = vunpack.c.l.b16 %v1128
  %v1168 = vunpack.c.l.b16 %v1129
  %v1169 = vunpack.c.l.b16 %v1130
  %v1170 = vunpack.c.l.b16 %v1131
  %v1171 = vunpack.c.l.b16 %v1132
  %v1172 = vunpack.c.l.b16 %v1133
  %v1173 = vunpack.c.l.b16 %v1134
  %v1174 = vunpack.c.l.b16 %v1135
  %v1175 = vunpack.c.l.b16 %v1136
  %v1176 = vunpack.c.l.b16 %v1137
  %v1177 = vpack.c.b16 %v1162, %v1161
  %v1178 = vpack.c.b16 %v1164, %v1163
  %v1179 = vpack.c.b16 %v1166, %v1165
  %v1180 = vpack.c.b16 %v1168, %v1167
  %v1181 = vpack.c.b16 %v1170, %v1169
  %v1182 = vpack.c.b16 %v1172, %v1171
  %v1183 = vpack.c.b16 %v1174, %v1173
  %v1184 = vpack.c.b16 %v1176, %v1175
  %1193 = vmatprep.subr.bf16.mxu0 0
  %1194 = vmatpush1.bf16.msra.mxu0 %v1177
  %1195 = vmatprep.subr.bf16.mxu0 0
  %1196 = vmatpush1.bf16.msra.mxu0 %v1178
  %1197 = vmatprep.subr.bf16.mxu0 0
  %1198 = vmatpush1.bf16.msra.mxu0 %v1179
  %1199 = vmatprep.subr.bf16.mxu0 0
  %1200 = vmatpush1.bf16.msra.mxu0 %v1180
  %1201 = vmatprep.subr.bf16.mxu0 0
  %1202 = vmatpush1.bf16.msra.mxu0 %v1181
  %1203 = vmatprep.subr.bf16.mxu0 0
  %1204 = vmatpush1.bf16.msra.mxu0 %v1182
  %1205 = vmatprep.subr.bf16.mxu0 0
  %1206 = vmatpush1.bf16.msra.mxu0 %v1183
  %1207 = vmatprep.subr.bf16.mxu0 0
  %1208 = vmatpush1.bf16.msra.mxu0 %v1184
  %1209 = vmatprep.subr.bf16.mxu0 0
  %1210 = vmatpush1.bf16.msra.mxu0 0
  %1211 = vmatprep.subr.bf16.mxu0 0
  %1212 = vmatpush1.bf16.msra.mxu0 0
  %1213 = vmatprep.subr.bf16.mxu0 0
  %1214 = vmatpush1.bf16.msra.mxu0 0
  %1215 = vmatprep.subr.bf16.mxu0 0
  %1216 = vmatpush1.bf16.msra.mxu0 0
  %1217 = vmatprep.subr.bf16.mxu0 0
  %1218 = vmatpush1.bf16.msra.mxu0 0
  %1219 = vmatprep.subr.bf16.mxu0 0
  %1220 = vmatpush1.bf16.msra.mxu0 0
  %1221 = vmatprep.subr.bf16.mxu0 0
  %1222 = vmatpush1.bf16.msra.mxu0 0
  %1223 = vmatprep.subr.bf16.mxu0 0
  %1224 = vmatpush1.bf16.msra.mxu0 0
  %1225 = vmatprep.mubr.bf16.mxu0 0
  %1226 = vmatmul.mubr.bf16.gmra.mrb[0].mxu0 %v1121
  %v1227 = vpop.f32.mrb[0].mxu0
  %v1228 = vadd.f32 %v1143, %v1227
  %v1229 = vpop.f32.mrb[0].mxu0
  %v1230 = vpop.f32.mrb[0].mxu0
  %v1231 = vadd.f32 %v1143, %v1230
  %v1232 = vpop.f32.mrb[0].mxu0
  %1233 = vdwg.mxu0
  %v1234 = vxor.u32 %v1228, 2147483648
  %v1235 = vxor.u32 %v1231, 2147483648
  %v1236 = vmul.f32 %v1234, 1.442695
  %v1237 = vpow.pop %v1236
  %v1238 = vmul.f32 %v1235, 1.442695
  %v1239 = vpow.pop %v1238
  %v1240 = vadd.f32 %v1237, 1.0
  %v1241 = vadd.f32 %v1239, 1.0
  %v1242 = vrcp.pop %v1240
  %v1243 = vmul.f32 1.0, %v1242
  %v1244 = vrcp.pop %v1241
  %v1245 = vmul.f32 1.0, %v1244
  %v1246 = vmul.f32 %v1228, %v1243
  %v1247 = vmul.f32 %v1231, %v1245
  %v1248 = vpack.c.bf16 %v1247, %v1246
  %v1249 = vld [vmem:[%s11] sm:$0xf]
  %v1250 = vld [vmem:[%s11 + $0x4] sm:$0xf]
  %v1251 = vld [vmem:[%s11 + $0x8] sm:$0xf]
  %v1252 = vld [vmem:[%s11 + $0xc] sm:$0xf]
  %v1253 = vld [vmem:[%s11 + $0x10] sm:$0xf]
  %v1254 = vld [vmem:[%s11 + $0x14] sm:$0xf]
  %v1255 = vld [vmem:[%s11 + $0x18] sm:$0xf]
  %v1256 = vld [vmem:[%s11 + $0x1c] sm:$0xf]
  %v1257 = vld [vmem:[%s11 + $0x20] sm:$0xf]
  %v1258 = vld [vmem:[%s11 + $0x24] sm:$0xf]
  %v1259 = vld [vmem:[%s11 + $0x28] sm:$0xf]
  %v1260 = vld [vmem:[%s11 + $0x2c] sm:$0xf]
  %v1261 = vld [vmem:[%s11 + $0x30] sm:$0xf]
  %v1262 = vld [vmem:[%s11 + $0x34] sm:$0xf]
  %v1263 = vld [vmem:[%s11 + $0x38] sm:$0xf]
  %v1264 = vld [vmem:[%s11 + $0x3c] sm:$0xf]
  %v1265 = vld [vmem:[%s12] sm:$0x1]
  %v1267 = vlaneseq
  %v1268 = vshrl.u32 %v1267, 7
  %v1269 = vsub.s32 0, %v1268
  %v1270 = vrot.slane %v1265, %v1269
  %v1288 = vunpack.c.l.b16 %v1249
  %v1289 = vunpack.c.l.b16 %v1250
  %v1290 = vunpack.c.l.b16 %v1251
  %v1291 = vunpack.c.l.b16 %v1252
  %v1292 = vunpack.c.l.b16 %v1253
  %v1293 = vunpack.c.l.b16 %v1254
  %v1294 = vunpack.c.l.b16 %v1255
  %v1295 = vunpack.c.l.b16 %v1256
  %v1296 = vunpack.c.l.b16 %v1257
  %v1297 = vunpack.c.l.b16 %v1258
  %v1298 = vunpack.c.l.b16 %v1259
  %v1299 = vunpack.c.l.b16 %v1260
  %v1300 = vunpack.c.l.b16 %v1261
  %v1301 = vunpack.c.l.b16 %v1262
  %v1302 = vunpack.c.l.b16 %v1263
  %v1303 = vunpack.c.l.b16 %v1264
  %v1304 = vpack.c.b16 %v1289, %v1288
  %v1305 = vpack.c.b16 %v1291, %v1290
  %v1306 = vpack.c.b16 %v1293, %v1292
  %v1307 = vpack.c.b16 %v1295, %v1294
  %v1308 = vpack.c.b16 %v1297, %v1296
  %v1309 = vpack.c.b16 %v1299, %v1298
  %v1310 = vpack.c.b16 %v1301, %v1300
  %v1311 = vpack.c.b16 %v1303, %v1302
  %1320 = vmatprep.subr.bf16.mxu0 0
  %1321 = vmatpush1.bf16.msra.mxu0 %v1304
  %1322 = vmatprep.subr.bf16.mxu0 0
  %1323 = vmatpush1.bf16.msra.mxu0 %v1305
  %1324 = vmatprep.subr.bf16.mxu0 0
  %1325 = vmatpush1.bf16.msra.mxu0 %v1306
  %1326 = vmatprep.subr.bf16.mxu0 0
  %1327 = vmatpush1.bf16.msra.mxu0 %v1307
  %1328 = vmatprep.subr.bf16.mxu0 0
  %1329 = vmatpush1.bf16.msra.mxu0 %v1308
  %1330 = vmatprep.subr.bf16.mxu0 0
  %1331 = vmatpush1.bf16.msra.mxu0 %v1309
  %1332 = vmatprep.subr.bf16.mxu0 0
  %1333 = vmatpush1.bf16.msra.mxu0 %v1310
  %1334 = vmatprep.subr.bf16.mxu0 0
  %1335 = vmatpush1.bf16.msra.mxu0 %v1311
  %1336 = vmatprep.subr.bf16.mxu0 0
  %1337 = vmatpush1.bf16.msra.mxu0 0
  %1338 = vmatprep.subr.bf16.mxu0 0
  %1339 = vmatpush1.bf16.msra.mxu0 0
  %1340 = vmatprep.subr.bf16.mxu0 0
  %1341 = vmatpush1.bf16.msra.mxu0 0
  %1342 = vmatprep.subr.bf16.mxu0 0
  %1343 = vmatpush1.bf16.msra.mxu0 0
  %1344 = vmatprep.subr.bf16.mxu0 0
  %1345 = vmatpush1.bf16.msra.mxu0 0
  %1346 = vmatprep.subr.bf16.mxu0 0
  %1347 = vmatpush1.bf16.msra.mxu0 0
  %1348 = vmatprep.subr.bf16.mxu0 0
  %1349 = vmatpush1.bf16.msra.mxu0 0
  %1350 = vmatprep.subr.bf16.mxu0 0
  %1351 = vmatpush1.bf16.msra.mxu0 0
  %1352 = vmatprep.mubr.bf16.mxu0 0
  %1353 = vmatmul.mubr.bf16.gmra.mrb[0].mxu0 %v1248
  %v1354 = vpop.f32.mrb[0].mxu0
  %v1355 = vadd.f32 %v1270, %v1354
  %v1356 = vpop.f32.mrb[0].mxu0
  %v1357 = vpop.f32.mrb[0].mxu0
  %v1358 = vadd.f32 %v1270, %v1357
  %v1359 = vpop.f32.mrb[0].mxu0
  %1360 = vdwg.mxu0
  %v1361 = vxor.u32 %v1355, 2147483648
  %v1362 = vxor.u32 %v1358, 2147483648
  %v1363 = vmul.f32 %v1361, 1.442695
  %v1364 = vpow.pop %v1363
  %v1365 = vmul.f32 %v1362, 1.442695
  %v1366 = vpow.pop %v1365
  %v1367 = vadd.f32 %v1364, 1.0
  %v1368 = vadd.f32 %v1366, 1.0
  %v1369 = vrcp.pop %v1367
  %v1370 = vmul.f32 1.0, %v1369
  %v1371 = vrcp.pop %v1368
  %v1372 = vmul.f32 1.0, %v1371
  %v1373 = vmul.f32 %v1355, %v1370
  %v1374 = vmul.f32 %v1358, %v1372
  %v1375 = vpack.c.bf16 %v1374, %v1373
  %v1376 = vld [vmem:[%s13] sm:$0xf]
  %v1377 = vld [vmem:[%s13 + $0x4] sm:$0xf]
  %v1378 = vld [vmem:[%s13 + $0x8] sm:$0xf]
  %v1379 = vld [vmem:[%s13 + $0xc] sm:$0xf]
  %v1380 = vld [vmem:[%s13 + $0x10] sm:$0xf]
  %v1381 = vld [vmem:[%s13 + $0x14] sm:$0xf]
  %v1382 = vld [vmem:[%s13 + $0x18] sm:$0xf]
  %v1383 = vld [vmem:[%s13 + $0x1c] sm:$0xf]
  %v1384 = vld [vmem:[%s13 + $0x20] sm:$0xf]
  %v1385 = vld [vmem:[%s13 + $0x24] sm:$0xf]
  %v1386 = vld [vmem:[%s13 + $0x28] sm:$0xf]
  %v1387 = vld [vmem:[%s13 + $0x2c] sm:$0xf]
  %v1388 = vld [vmem:[%s13 + $0x30] sm:$0xf]
  %v1389 = vld [vmem:[%s13 + $0x34] sm:$0xf]
  %v1390 = vld [vmem:[%s13 + $0x38] sm:$0xf]
  %v1391 = vld [vmem:[%s13 + $0x3c] sm:$0xf]
  %v1392 = vld [vmem:[%s14] sm:$0x1]
  %v1394 = vlaneseq
  %v1395 = vshrl.u32 %v1394, 7
  %v1396 = vsub.s32 0, %v1395
  %v1397 = vrot.slane %v1392, %v1396
  %v1415 = vunpack.c.l.b16 %v1376
  %v1416 = vunpack.c.l.b16 %v1377
  %v1417 = vunpack.c.l.b16 %v1378
  %v1418 = vunpack.c.l.b16 %v1379
  %v1419 = vunpack.c.l.b16 %v1380
  %v1420 = vunpack.c.l.b16 %v1381
  %v1421 = vunpack.c.l.b16 %v1382
  %v1422 = vunpack.c.l.b16 %v1383
  %v1423 = vunpack.c.l.b16 %v1384
  %v1424 = vunpack.c.l.b16 %v1385
  %v1425 = vunpack.c.l.b16 %v1386
  %v1426 = vunpack.c.l.b16 %v1387
  %v1427 = vunpack.c.l.b16 %v1388
  %v1428 = vunpack.c.l.b16 %v1389
  %v1429 = vunpack.c.l.b16 %v1390
  %v1430 = vunpack.c.l.b16 %v1391
  %v1431 = vpack.c.b16 %v1416, %v1415
  %v1432 = vpack.c.b16 %v1418, %v1417
  %v1433 = vpack.c.b16 %v1420, %v1419
  %v1434 = vpack.c.b16 %v1422, %v1421
  %v1435 = vpack.c.b16 %v1424, %v1423
  %v1436 = vpack.c.b16 %v1426, %v1425
  %v1437 = vpack.c.b16 %v1428, %v1427
  %v1438 = vpack.c.b16 %v1430, %v1429
  %1447 = vmatprep.subr.bf16.mxu0 0
  %1448 = vmatpush1.bf16.msra.mxu0 %v1431
  %1449 = vmatprep.subr.bf16.mxu0 0
  %1450 = vmatpush1.bf16.msra.mxu0 %v1432
  %1451 = vmatprep.subr.bf16.mxu0 0
  %1452 = vmatpush1.bf16.msra.mxu0 %v1433
  %1453 = vmatprep.subr.bf16.mxu0 0
  %1454 = vmatpush1.bf16.msra.mxu0 %v1434
  %1455 = vmatprep.subr.bf16.mxu0 0
  %1456 = vmatpush1.bf16.msra.mxu0 %v1435
  %1457 = vmatprep.subr.bf16.mxu0 0
  %1458 = vmatpush1.bf16.msra.mxu0 %v1436
  %1459 = vmatprep.subr.bf16.mxu0 0
  %1460 = vmatpush1.bf16.msra.mxu0 %v1437
  %1461 = vmatprep.subr.bf16.mxu0 0
  %1462 = vmatpush1.bf16.msra.mxu0 %v1438
  %1463 = vmatprep.subr.bf16.mxu0 0
  %1464 = vmatpush1.bf16.msra.mxu0 0
  %1465 = vmatprep.subr.bf16.mxu0 0
  %1466 = vmatpush1.bf16.msra.mxu0 0
  %1467 = vmatprep.subr.bf16.mxu0 0
  %1468 = vmatpush1.bf16.msra.mxu0 0
  %1469 = vmatprep.subr.bf16.mxu0 0
  %1470 = vmatpush1.bf16.msra.mxu0 0
  %1471 = vmatprep.subr.bf16.mxu0 0
  %1472 = vmatpush1.bf16.msra.mxu0 0
  %1473 = vmatprep.subr.bf16.mxu0 0
  %1474 = vmatpush1.bf16.msra.mxu0 0
  %1475 = vmatprep.subr.bf16.mxu0 0
  %1476 = vmatpush1.bf16.msra.mxu0 0
  %1477 = vmatprep.subr.bf16.mxu0 0
  %1478 = vmatpush1.bf16.msra.mxu0 0
  %1479 = vmatprep.mubr.bf16.mxu0 0
  %1480 = vmatmul.mubr.bf16.gmra.mrb[0].mxu0 %v1375
  %v1481 = vpop.f32.mrb[0].mxu0
  %v1482 = vadd.f32 %v1397, %v1481
  %v1483 = vpop.f32.mrb[0].mxu0
  %v1484 = vpop.f32.mrb[0].mxu0
  %v1485 = vadd.f32 %v1397, %v1484
  %v1486 = vpop.f32.mrb[0].mxu0
  %1487 = vdwg.mxu0
  %v1488 = vxor.u32 %v1482, 2147483648
  %v1489 = vxor.u32 %v1485, 2147483648
  %v1490 = vmul.f32 %v1488, 1.442695
  %v1491 = vpow.pop %v1490
  %v1492 = vmul.f32 %v1489, 1.442695
  %v1493 = vpow.pop %v1492
  %v1494 = vadd.f32 %v1491, 1.0
  %v1495 = vadd.f32 %v1493, 1.0
  %v1496 = vrcp.pop %v1494
  %v1497 = vmul.f32 1.0, %v1496
  %v1498 = vrcp.pop %v1495
  %v1499 = vmul.f32 1.0, %v1498
  %v1500 = vmul.f32 %v1482, %v1497
  %v1501 = vmul.f32 %v1485, %v1499
  %v1502 = vpack.c.bf16 %v1501, %v1500
  %v1503 = vld [vmem:[%s15] sm:$0xf]
  %v1504 = vld [vmem:[%s15 + $0x4] sm:$0xf]
  %v1505 = vld [vmem:[%s15 + $0x8] sm:$0xf]
  %v1506 = vld [vmem:[%s15 + $0xc] sm:$0xf]
  %v1507 = vld [vmem:[%s15 + $0x10] sm:$0xf]
  %v1508 = vld [vmem:[%s15 + $0x14] sm:$0xf]
  %v1509 = vld [vmem:[%s15 + $0x18] sm:$0xf]
  %v1510 = vld [vmem:[%s15 + $0x1c] sm:$0xf]
  %v1511 = vld [vmem:[%s15 + $0x20] sm:$0xf]
  %v1512 = vld [vmem:[%s15 + $0x24] sm:$0xf]
  %v1513 = vld [vmem:[%s15 + $0x28] sm:$0xf]
  %v1514 = vld [vmem:[%s15 + $0x2c] sm:$0xf]
  %v1515 = vld [vmem:[%s15 + $0x30] sm:$0xf]
  %v1516 = vld [vmem:[%s15 + $0x34] sm:$0xf]
  %v1517 = vld [vmem:[%s15 + $0x38] sm:$0xf]
  %v1518 = vld [vmem:[%s15 + $0x3c] sm:$0xf]
  %v1519 = vld [vmem:[%s16] sm:$0x1]
  %v1521 = vlaneseq
  %v1522 = vshrl.u32 %v1521, 7
  %v1523 = vsub.s32 0, %v1522
  %v1524 = vrot.slane %v1519, %v1523
  %v1542 = vunpack.c.l.b16 %v1503
  %v1543 = vunpack.c.l.b16 %v1504
  %v1544 = vunpack.c.l.b16 %v1505
  %v1545 = vunpack.c.l.b16 %v1506
  %v1546 = vunpack.c.l.b16 %v1507
  %v1547 = vunpack.c.l.b16 %v1508
  %v1548 = vunpack.c.l.b16 %v1509
  %v1549 = vunpack.c.l.b16 %v1510
  %v1550 = vunpack.c.l.b16 %v1511
  %v1551 = vunpack.c.l.b16 %v1512
  %v1552 = vunpack.c.l.b16 %v1513
  %v1553 = vunpack.c.l.b16 %v1514
  %v1554 = vunpack.c.l.b16 %v1515
  %v1555 = vunpack.c.l.b16 %v1516
  %v1556 = vunpack.c.l.b16 %v1517
  %v1557 = vunpack.c.l.b16 %v1518
  %v1558 = vpack.c.b16 %v1543, %v1542
  %v1559 = vpack.c.b16 %v1545, %v1544
  %v1560 = vpack.c.b16 %v1547, %v1546
  %v1561 = vpack.c.b16 %v1549, %v1548
  %v1562 = vpack.c.b16 %v1551, %v1550
  %v1563 = vpack.c.b16 %v1553, %v1552
  %v1564 = vpack.c.b16 %v1555, %v1554
  %v1565 = vpack.c.b16 %v1557, %v1556
  %1574 = vmatprep.subr.bf16.mxu0 0
  %1575 = vmatpush1.bf16.msra.mxu0 %v1558
  %1576 = vmatprep.subr.bf16.mxu0 0
  %1577 = vmatpush1.bf16.msra.mxu0 %v1559
  %1578 = vmatprep.subr.bf16.mxu0 0
  %1579 = vmatpush1.bf16.msra.mxu0 %v1560
  %1580 = vmatprep.subr.bf16.mxu0 0
  %1581 = vmatpush1.bf16.msra.mxu0 %v1561
  %1582 = vmatprep.subr.bf16.mxu0 0
  %1583 = vmatpush1.bf16.msra.mxu0 %v1562
  %1584 = vmatprep.subr.bf16.mxu0 0
  %1585 = vmatpush1.bf16.msra.mxu0 %v1563
  %1586 = vmatprep.subr.bf16.mxu0 0
  %1587 = vmatpush1.bf16.msra.mxu0 %v1564
  %1588 = vmatprep.subr.bf16.mxu0 0
  %1589 = vmatpush1.bf16.msra.mxu0 %v1565
  %1590 = vmatprep.subr.bf16.mxu0 0
  %1591 = vmatpush1.bf16.msra.mxu0 0
  %1592 = vmatprep.subr.bf16.mxu0 0
  %1593 = vmatpush1.bf16.msra.mxu0 0
  %1594 = vmatprep.subr.bf16.mxu0 0
  %1595 = vmatpush1.bf16.msra.mxu0 0
  %1596 = vmatprep.subr.bf16.mxu0 0
  %1597 = vmatpush1.bf16.msra.mxu0 0
  %1598 = vmatprep.subr.bf16.mxu0 0
  %1599 = vmatpush1.bf16.msra.mxu0 0
  %1600 = vmatprep.subr.bf16.mxu0 0
  %1601 = vmatpush1.bf16.msra.mxu0 0
  %1602 = vmatprep.subr.bf16.mxu0 0
  %1603 = vmatpush1.bf16.msra.mxu0 0
  %1604 = vmatprep.subr.bf16.mxu0 0
  %1605 = vmatpush1.bf16.msra.mxu0 0
  %1606 = vmatprep.mubr.bf16.mxu0 0
  %1607 = vmatmul.mubr.bf16.gmra.mrb[0].mxu0 %v1502
  %v1608 = vpop.f32.mrb[0].mxu0
  %v1609 = vadd.f32 %v1524, %v1608
  %v1610 = vpop.f32.mrb[0].mxu0
  %v1611 = vpop.f32.mrb[0].mxu0
  %v1612 = vadd.f32 %v1524, %v1611
  %v1613 = vpop.f32.mrb[0].mxu0
  %1614 = vdwg.mxu0
  %v1615 = vxor.u32 %v1609, 2147483648
  %v1616 = vxor.u32 %v1612, 2147483648
  %v1617 = vmul.f32 %v1615, 1.442695
  %v1618 = vpow.pop %v1617
  %v1619 = vmul.f32 %v1616, 1.442695
  %v1620 = vpow.pop %v1619
  %v1621 = vadd.f32 %v1618, 1.0
  %v1622 = vadd.f32 %v1620, 1.0
  %v1623 = vrcp.pop %v1621
  %v1624 = vmul.f32 1.0, %v1623
  %v1625 = vrcp.pop %v1622
  %v1626 = vmul.f32 1.0, %v1625
  %v1627 = vmul.f32 %v1609, %v1624
  %v1628 = vmul.f32 %v1612, %v1626
  %v1629 = vpack.c.bf16 %v1628, %v1627
  %v1630 = vld [vmem:[%s17] sm:$0xf]
  %v1631 = vld [vmem:[%s17 + $0x4] sm:$0xf]
  %v1632 = vld [vmem:[%s17 + $0x8] sm:$0xf]
  %v1633 = vld [vmem:[%s17 + $0xc] sm:$0xf]
  %v1634 = vld [vmem:[%s17 + $0x10] sm:$0xf]
  %v1635 = vld [vmem:[%s17 + $0x14] sm:$0xf]
  %v1636 = vld [vmem:[%s17 + $0x18] sm:$0xf]
  %v1637 = vld [vmem:[%s17 + $0x1c] sm:$0xf]
  %v1638 = vld [vmem:[%s17 + $0x20] sm:$0xf]
  %v1639 = vld [vmem:[%s17 + $0x24] sm:$0xf]
  %v1640 = vld [vmem:[%s17 + $0x28] sm:$0xf]
  %v1641 = vld [vmem:[%s17 + $0x2c] sm:$0xf]
  %v1642 = vld [vmem:[%s17 + $0x30] sm:$0xf]
  %v1643 = vld [vmem:[%s17 + $0x34] sm:$0xf]
  %v1644 = vld [vmem:[%s17 + $0x38] sm:$0xf]
  %v1645 = vld [vmem:[%s17 + $0x3c] sm:$0xf]
  %v1646 = vld [vmem:[%s18] sm:$0x1]
  %v1648 = vlaneseq
  %v1649 = vshrl.u32 %v1648, 7
  %v1650 = vsub.s32 0, %v1649
  %v1651 = vrot.slane %v1646, %v1650
  %v1669 = vunpack.c.l.b16 %v1630
  %v1670 = vunpack.c.l.b16 %v1631
  %v1671 = vunpack.c.l.b16 %v1632
  %v1672 = vunpack.c.l.b16 %v1633
  %v1673 = vunpack.c.l.b16 %v1634
  %v1674 = vunpack.c.l.b16 %v1635
  %v1675 = vunpack.c.l.b16 %v1636
  %v1676 = vunpack.c.l.b16 %v1637
  %v1677 = vunpack.c.l.b16 %v1638
  %v1678 = vunpack.c.l.b16 %v1639
  %v1679 = vunpack.c.l.b16 %v1640
  %v1680 = vunpack.c.l.b16 %v1641
  %v1681 = vunpack.c.l.b16 %v1642
  %v1682 = vunpack.c.l.b16 %v1643
  %v1683 = vunpack.c.l.b16 %v1644
  %v1684 = vunpack.c.l.b16 %v1645
  %v1685 = vpack.c.b16 %v1670, %v1669
  %v1686 = vpack.c.b16 %v1672, %v1671
  %v1687 = vpack.c.b16 %v1674, %v1673
  %v1688 = vpack.c.b16 %v1676, %v1675
  %v1689 = vpack.c.b16 %v1678, %v1677
  %v1690 = vpack.c.b16 %v1680, %v1679
  %v1691 = vpack.c.b16 %v1682, %v1681
  %v1692 = vpack.c.b16 %v1684, %v1683
  %1701 = vmatprep.subr.bf16.mxu0 0
  %1702 = vmatpush1.bf16.msra.mxu0 %v1685
  %1703 = vmatprep.subr.bf16.mxu0 0
  %1704 = vmatpush1.bf16.msra.mxu0 %v1686
  %1705 = vmatprep.subr.bf16.mxu0 0
  %1706 = vmatpush1.bf16.msra.mxu0 %v1687
  %1707 = vmatprep.subr.bf16.mxu0 0
  %1708 = vmatpush1.bf16.msra.mxu0 %v1688
  %1709 = vmatprep.subr.bf16.mxu0 0
  %1710 = vmatpush1.bf16.msra.mxu0 %v1689
  %1711 = vmatprep.subr.bf16.mxu0 0
  %1712 = vmatpush1.bf16.msra.mxu0 %v1690
  %1713 = vmatprep.subr.bf16.mxu0 0
  %1714 = vmatpush1.bf16.msra.mxu0 %v1691
  %1715 = vmatprep.subr.bf16.mxu0 0
  %1716 = vmatpush1.bf16.msra.mxu0 %v1692
  %1717 = vmatprep.subr.bf16.mxu0 0
  %1718 = vmatpush1.bf16.msra.mxu0 0
  %1719 = vmatprep.subr.bf16.mxu0 0
  %1720 = vmatpush1.bf16.msra.mxu0 0
  %1721 = vmatprep.subr.bf16.mxu0 0
  %1722 = vmatpush1.bf16.msra.mxu0 0
  %1723 = vmatprep.subr.bf16.mxu0 0
  %1724 = vmatpush1.bf16.msra.mxu0 0
  %1725 = vmatprep.subr.bf16.mxu0 0
  %1726 = vmatpush1.bf16.msra.mxu0 0
  %1727 = vmatprep.subr.bf16.mxu0 0
  %1728 = vmatpush1.bf16.msra.mxu0 0
  %1729 = vmatprep.subr.bf16.mxu0 0
  %1730 = vmatpush1.bf16.msra.mxu0 0
  %1731 = vmatprep.subr.bf16.mxu0 0
  %1732 = vmatpush1.bf16.msra.mxu0 0
  %1733 = vmatprep.mubr.bf16.mxu0 0
  %1734 = vmatmul.mubr.bf16.gmra.mrb[0].mxu0 %v1629
  %v1735 = vpop.f32.mrb[0].mxu0
  %v1736 = vadd.f32 %v1651, %v1735
  %v1737 = vpop.f32.mrb[0].mxu0
  %v1738 = vpop.f32.mrb[0].mxu0
  %v1739 = vadd.f32 %v1651, %v1738
  %v1740 = vpop.f32.mrb[0].mxu0
  %1741 = vdwg.mxu0
  %v1742 = vpack.c.bf16 %v1739, %v1736
  %v1744 = vunpack.c.l.b16 %v1742
  %v1745 = vunpack.c.h.b16 %v1742
  %v1746 = vpack.c.b16 %v1744, %v1744
  %v1747 = vpack.c.b16 %v1745, %v1745
  %1750 = vst [vmem:[%s19] sm:$0xf] %v1746
  %1751 = vst [vmem:[%s19 + $0x4] sm:$0xf] %v1747
  // Predicated region
  $region78: #{simple_mlp_silu_forward.1} parent=0 // pred_check
    _
  $region79: #{simple_mlp_silu_forward.1} parent=0 // pred_check_branch
    %1753 = sbr.rel (0) target = $region81
  $region80: #{simple_mlp_silu_forward.1} parent=0 // pred_region
    _
  $region81: #{simple_mlp_silu_forward.1} parent=0 // pred_fallthru
    _
  // Predicated region
  $region82: #{simple_mlp_silu_forward.1} parent=0 // pred_check
    _
  $region83: #{simple_mlp_silu_forward.1} parent=0 // pred_check_branch
    %1755 = sbr.rel (0) target = $region85
  $region84: #{simple_mlp_silu_forward.1} parent=0 // pred_region
    _
  $region85: #{simple_mlp_silu_forward.1} parent=0 // pred_fallthru
    _

</llo_original>
